<compile_context>
chip_gen: v7x
topology: tpu7x:2x2x1
jax: 0.10.0
libtpu: 0.0.40
codegen_flags: <defaults>
</compile_context>

<pallas_src>
import math

import jax
import jax.numpy as jnp
from jax import lax
from jax.experimental import pallas as pl
from jax.experimental.pallas import tpu as pltpu

hidden_dim = 32
input_dim = 1
num_layers = 2   # kernel below is written for exactly 2 layers (matches module)
output_dim = 1


def _lstm_kernel(xw0_ref,                   # (T, Bblk, 4H) f32  precomputed x@W_ih0 + b0 (i/f/o cols pre-scaled)
                 whh0_ref,                  # (H, 4H)  mxu dtype (i/f/o cols pre-scaled)
                 wih1_ref,                  # (H, 4H)  mxu dtype (i/f/o cols pre-scaled)
                 whh1_ref,                  # (H, 4H)  mxu dtype (i/f/o cols pre-scaled)
                 b1_ref,                    # (1, 4H)  f32       (i/f/o cols pre-scaled)
                 wfc_ref, bfc_ref,          # (H, O), (1, O) f32
                 out_ref):                  # (Bblk, O) f32
    T, B, fourH = xw0_ref.shape
    H = whh0_ref.shape[0]

    # Hoist all weight reads / broadcasts out of the time loop.
    whh0 = whh0_ref[...]
    wih1 = wih1_ref[...]
    whh1 = whh1_ref[...]
    mxu_dtype = whh0.dtype
    b1 = jnp.broadcast_to(b1_ref[...], (B, fourH)).astype(jnp.float32)

    def gates_to_hc(gates, c):
        # Gate order matches PyTorch: [i, f, g, o].  i/f/o pre-activations were
        # pre-scaled by 0.5 on the host, so one full-width tanh gives:
        #   sigmoid(x) = 0.5 * tanh(x/2) + 0.5  for i/f/o,  tanh(x) for g.
        t = jnp.tanh(gates)                      # EUP pass 1 (full (B,4H) slab)
        s = t * 0.5 + 0.5                        # cheap VPU FMA, full width
        i = s[:, 0 * H:1 * H]
        f = s[:, 1 * H:2 * H]
        g = t[:, 2 * H:3 * H]
        o = s[:, 3 * H:4 * H]
        c_new = f * c + i * g
        h_new = o * jnp.tanh(c_new)              # EUP pass 2
        return h_new, c_new

    def step(t_idx, carry):
        h1, c1, h2, c2 = carry
        # Layer-1 recurrent matmul first: depends only on h2(t-1), so its MXU
        # latency hides behind the entire layer-0 cell computation below.
        g1_hh = jnp.dot(h2.astype(mxu_dtype), whh1,
                        preferred_element_type=jnp.float32)
        # Layer 0: input projection was precomputed host-side; aligned
        # leading-dim read of the (B, 4H) tile for this timestep.
        g0 = xw0_ref[t_idx] + jnp.dot(h1.astype(mxu_dtype), whh0,
                                      preferred_element_type=jnp.float32)
        h1, c1 = gates_to_hc(g0, c1)
        # Layer 1: second MXU push, then VPU adds (no lane concat on the chain).
        g1 = g1_hh + b1 + jnp.dot(h1.astype(mxu_dtype), wih1,
                                  preferred_element_type=jnp.float32)
        h2, c2 = gates_to_hc(g1, c2)
        return (h1, c1, h2, c2)

    zeros = jnp.zeros((B, H), jnp.float32)       # h0 / c0 = 0, as in the module
    unroll = True if T <= 32 else 8
    _, _, h2, _ = lax.fori_loop(0, T, step, (zeros, zeros, zeros, zeros),
                                unroll=unroll)

    out = jnp.dot(h2, wfc_ref[...], preferred_element_type=jnp.float32) + bfc_ref[...]
    out_ref[...] = out.astype(out_ref.dtype)


def lstm_forward(x, params, *, mxu_dtype=jnp.bfloat16):
    """x: (B, T, I) float32 -> (B, output_dim) float32.

    mxu_dtype: dtype of the recurrent-matmul operands (weights + h feeding the
    MXU).  bf16 is the fast path on v6e/v7x (and fine on v5e); accumulation,
    cell state and all elementwise/EUP math stay f32 (required on v5e).
    Pass jnp.float32 for an exact-f32 forward.
    """
    B, T, I = x.shape
    H = hidden_dim
    O = output_dim

    # --- Host-side weight prep (all-tanh trick): scale i/f/o gate columns ---
    gate_scale = jnp.concatenate([
        jnp.full((2 * H,), 0.5, jnp.float32),    # i, f
        jnp.ones((H,), jnp.float32),             # g (stays tanh)
        jnp.full((H,), 0.5, jnp.float32),        # o
    ])

    def prescale(w):
        return w * gate_scale                    # broadcasts over last dim 4H

    wih0 = prescale(params["wih0"])              # (I, 4H) f32
    b0 = prescale(params["b0"])                  # (1, 4H) f32
    whh0 = prescale(params["whh0"]).astype(mxu_dtype)
    wih1 = prescale(params["wih1"]).astype(mxu_dtype)
    whh1 = prescale(params["whh1"]).astype(mxu_dtype)
    b1 = prescale(params["b1"])

    # --- Layer-0 input projection hoisted out of the kernel (K = I = 1). ---
    # XLA fuses this broadcast multiply-add; layout is time-major (T, B, 4H)
    # so the kernel's per-step read is a tile-aligned leading-dim index.
    x_tb = jnp.transpose(x, (1, 0, 2))                            # (T, B, I)
    xw0 = jnp.dot(x_tb, wih0) + b0                                # (T, B, 4H) f32

    # --- Pad batch to a full 8-row sublane tile; grid over batch blocks. ---
    B_blk = 8
    B_pad = ((B + B_blk - 1) // B_blk) * B_blk
    if B_pad != B:
        xw0 = jnp.pad(xw0, ((0, 0), (0, B_pad - B), (0, 0)))
    n_blocks = B_pad // B_blk

    grid_spec = pltpu.PrefetchScalarGridSpec(
        num_scalar_prefetch=0,
        grid=(n_blocks,),
        in_specs=[
            pl.BlockSpec((T, B_blk, 4 * H), lambda b: (0, b, 0)),   # xw0
            pl.BlockSpec((H, 4 * H), lambda b: (0, 0)),             # whh0
            pl.BlockSpec((H, 4 * H), lambda b: (0, 0)),             # wih1
            pl.BlockSpec((H, 4 * H), lambda b: (0, 0)),             # whh1
            pl.BlockSpec((1, 4 * H), lambda b: (0, 0)),             # b1
            pl.BlockSpec((H, O), lambda b: (0, 0)),                 # wfc
            pl.BlockSpec((1, O), lambda b: (0, 0)),                 # bfc
        ],
        out_specs=pl.BlockSpec((B_blk, O), lambda b: (b, 0)),
    )

    out = pl.pallas_call(
        _lstm_kernel,
        out_shape=jax.ShapeDtypeStruct((B_pad, O), jnp.float32),
        grid_spec=grid_spec,
        compiler_params=pltpu.CompilerParams(
            dimension_semantics=("parallel",),   # v7x: shard batch blocks across both TCs
            vmem_limit_bytes=32 << 20,           # explicit scoped-VMEM guard (portable v5e..v7x)
        ),
    )(xw0, whh0, wih1, whh1, b1, params["wfc"], params["bfc"])

    return out[:B]


def init_params(key):
    """Deterministic init mirroring PyTorch's U(-1/sqrt(H), 1/sqrt(H)).

    Stored transposed (in_features, 4H) so all matmuls are plain `x @ W`;
    gate order is PyTorch's [i, f, g, o].  No gate pre-scaling here — that is
    applied inside lstm_forward.
    """
    H, I, O = hidden_dim, input_dim, output_dim
    k = 1.0 / math.sqrt(H)
    keys = jax.random.split(key, 12)

    def u(kk, shape):
        return jax.random.uniform(kk, shape, jnp.float32, minval=-k, maxval=k)

    wih0 = u(keys[0], (I, 4 * H))
    whh0 = u(keys[1], (H, 4 * H))
    b0 = (u(keys[2], (4 * H,)) + u(keys[3], (4 * H,))).reshape(1, 4 * H)  # bias_ih + bias_hh
    wih1 = u(keys[4], (H, 4 * H))
    whh1 = u(keys[5], (H, 4 * H))
    b1 = (u(keys[6], (4 * H,)) + u(keys[7], (4 * H,))).reshape(1, 4 * H)
    # fc: nn.Linear(H, O) also uses U(-1/sqrt(H), 1/sqrt(H)).
    wfc = u(keys[8], (H, O))
    bfc = u(keys[9], (O,)).reshape(1, O)

    return dict(wih0=wih0, whh0=whh0, b0=b0,
                wih1=wih1, whh1=whh1, b1=b1,
                wfc=wfc, bfc=bfc)


def _reference(x, p):
    """Pure-JAX f32 reference of the same forward (sanity check)."""
    B, T, I = x.shape
    H = hidden_dim

    def cell(x_t, h, c, wih, whh, b):
        g = x_t @ wih + h @ whh + b
        i = jax.nn.sigmoid(g[:, 0 * H:1 * H])
        f = jax.nn.sigmoid(g[:, 1 * H:2 * H])
        gg = jnp.tanh(g[:, 2 * H:3 * H])
        o = jax.nn.sigmoid(g[:, 3 * H:4 * H])
        c = f * c + i * gg
        return o * jnp.tanh(c), c

    h1 = c1 = h2 = c2 = jnp.zeros((B, H), jnp.float32)
    for t in range(T):
        h1, c1 = cell(x[:, t, :], h1, c1, p["wih0"], p["whh0"], p["b0"])
        h2, c2 = cell(h1, h2, c2, p["wih1"], p["whh1"], p["b1"])
    return h2 @ p["wfc"] + p["bfc"]


if __name__ == "__main__":
    key = jax.random.PRNGKey(0)
    kx, kp = jax.random.split(key)

    B, T = 2, 8   # per-step latency is fixed; larger B (padded to 8) is ~free throughput.
    x = jax.random.normal(kx, (B, T, input_dim), jnp.float32)
    params = init_params(kp)

    ref = _reference(x, params)

    # Exact-f32 MXU path: tight check against the pure-JAX reference.
    out_f32 = jax.block_until_ready(lstm_forward(x, params, mxu_dtype=jnp.float32))
    assert out_f32.shape == (B, output_dim), out_f32.shape
    assert jnp.allclose(out_f32, ref, atol=1e-4, rtol=1e-4), (out_f32, ref)

    # bf16 MXU-operand fast path (v6e/v7x): relaxed tolerance, state stays f32.
    out_bf16 = jax.block_until_ready(lstm_forward(x, params, mxu_dtype=jnp.bfloat16))
    assert out_bf16.shape == (B, output_dim), out_bf16.shape
    assert jnp.allclose(out_bf16, ref, atol=2e-2, rtol=2e-2), (out_bf16, ref)

    print("KERNEL_OK")
</pallas_src>

<mosaic_0001>
module attributes {stable_mosaic.version = 11 : i64} {
  func.func @_lstm_kernel(%arg0: i32, %arg1: memref<8x8x128xf32, #tpu.memory_space<vmem>>, %arg2: memref<32x128xf32, #tpu.memory_space<vmem>>, %arg3: memref<32x128xf32, #tpu.memory_space<vmem>>, %arg4: memref<32x128xf32, #tpu.memory_space<vmem>>, %arg5: memref<1x128xf32, #tpu.memory_space<vmem>>, %arg6: memref<32x1xf32, #tpu.memory_space<vmem>>, %arg7: memref<1x1xf32, #tpu.memory_space<vmem>>, %arg8: memref<8x1xf32, #tpu.memory_space<vmem>>) attributes {dimension_semantics = [#tpu.dimension_semantics<parallel>], iteration_bounds = array<i64: 1>, scalar_prefetch = 0 : i64, scratch_operands = 0 : i64, tpu.core_type = #tpu.core_type<tc>, window_params = [{transform_indices = @transform_0, window_bounds = array<i64: 8, 8, 128>}, {pipeline_mode = #tpu.pipeline_mode<synchronous>, transform_indices = @transform_1, window_bounds = array<i64: 32, 128>}, {pipeline_mode = #tpu.pipeline_mode<synchronous>, transform_indices = @transform_2, window_bounds = array<i64: 32, 128>}, {pipeline_mode = #tpu.pipeline_mode<synchronous>, transform_indices = @transform_3, window_bounds = array<i64: 32, 128>}, {pipeline_mode = #tpu.pipeline_mode<synchronous>, transform_indices = @transform_4, window_bounds = array<i64: 1, 128>}, {pipeline_mode = #tpu.pipeline_mode<synchronous>, transform_indices = @transform_5, window_bounds = array<i64: 32, 1>}, {pipeline_mode = #tpu.pipeline_mode<synchronous>, transform_indices = @transform_6, window_bounds = array<i64: 1, 1>}, {transform_indices = @transform_7, window_bounds = array<i64: 8, 1>}]} {
    %c0 = arith.constant 0 : index
    %c0_0 = arith.constant 0 : index
    %0 = vector.load %arg2[%c0, %c0_0] : memref<32x128xf32, #tpu.memory_space<vmem>>, vector<32x128xf32>
    %c0_1 = arith.constant 0 : index
    %c0_2 = arith.constant 0 : index
    %1 = vector.load %arg3[%c0_1, %c0_2] : memref<32x128xf32, #tpu.memory_space<vmem>>, vector<32x128xf32>
    %c0_3 = arith.constant 0 : index
    %c0_4 = arith.constant 0 : index
    %2 = vector.load %arg4[%c0_3, %c0_4] : memref<32x128xf32, #tpu.memory_space<vmem>>, vector<32x128xf32>
    %c0_5 = arith.constant 0 : index
    %c0_6 = arith.constant 0 : index
    %3 = vector.load %arg5[%c0_5, %c0_6] : memref<1x128xf32, #tpu.memory_space<vmem>>, vector<1x128xf32>
    %4 = vector.shape_cast %3 : vector<1x128xf32> to vector<1x128xf32>
    %5 = vector.broadcast %4 : vector<1x128xf32> to vector<8x128xf32>
    %cst = arith.constant 0.000000e+00 : f32
    %6 = vector.broadcast %cst : f32 to vector<8x32xf32>
    %c0_i32 = arith.constant 0 : i32
    %cst_7 = arith.constant dense<0.000000e+00> : vector<8x128xf32>
    %7 = tpu.matmul %6, %2, %cst_7 {dimension_numbers = #tpu.dot_dimension_numbers<[1], [0], [0], [1], [0, 0, 1, 1], [], []>} : vector<8x32xf32>, vector<32x128xf32>, vector<8x128xf32> -> vector<8x128xf32>
    %8 = arith.index_cast %c0_i32 : i32 to index
    %c0_8 = arith.constant 0 : index
    %c0_9 = arith.constant 0 : index
    %9 = vector.load %arg1[%8, %c0_8, %c0_9] : memref<8x8x128xf32, #tpu.memory_space<vmem>>, vector<1x8x128xf32>
    %10 = vector.shape_cast %9 : vector<1x8x128xf32> to vector<8x128xf32>
    %cst_10 = arith.constant dense<0.000000e+00> : vector<8x128xf32>
    %11 = tpu.matmul %6, %0, %cst_10 {dimension_numbers = #tpu.dot_dimension_numbers<[1], [0], [0], [1], [0, 0, 1, 1], [], []>} : vector<8x32xf32>, vector<32x128xf32>, vector<8x128xf32> -> vector<8x128xf32>
    %12 = arith.addf %10, %11 : vector<8x128xf32>
    %13 = math.tanh %12 : vector<8x128xf32>
    %cst_11 = arith.constant 5.000000e-01 : f32
    %14 = vector.broadcast %cst_11 : f32 to vector<8x128xf32>
    %15 = arith.mulf %13, %14 : vector<8x128xf32>
    %cst_12 = arith.constant 5.000000e-01 : f32
    %16 = vector.broadcast %cst_12 : f32 to vector<8x128xf32>
    %17 = arith.addf %15, %16 : vector<8x128xf32>
    %18 = vector.extract_strided_slice %17 {offsets = [0, 0], sizes = [8, 32], strides = [1, 1]} : vector<8x128xf32> to vector<8x32xf32>
    %19 = vector.extract_strided_slice %17 {offsets = [0, 32], sizes = [8, 32], strides = [1, 1]} : vector<8x128xf32> to vector<8x32xf32>
    %20 = vector.extract_strided_slice %13 {offsets = [0, 64], sizes = [8, 32], strides = [1, 1]} : vector<8x128xf32> to vector<8x32xf32>
    %21 = vector.extract_strided_slice %17 {offsets = [0, 96], sizes = [8, 32], strides = [1, 1]} : vector<8x128xf32> to vector<8x32xf32>
    %22 = arith.mulf %19, %6 : vector<8x32xf32>
    %23 = arith.mulf %18, %20 : vector<8x32xf32>
    %24 = arith.addf %22, %23 : vector<8x32xf32>
    %25 = math.tanh %24 : vector<8x32xf32>
    %26 = arith.mulf %21, %25 : vector<8x32xf32>
    %27 = arith.addf %7, %5 : vector<8x128xf32>
    %cst_13 = arith.constant dense<0.000000e+00> : vector<8x128xf32>
    %28 = tpu.matmul %26, %1, %cst_13 {dimension_numbers = #tpu.dot_dimension_numbers<[1], [0], [0], [1], [0, 0, 1, 1], [], []>} : vector<8x32xf32>, vector<32x128xf32>, vector<8x128xf32> -> vector<8x128xf32>
    %29 = arith.addf %27, %28 : vector<8x128xf32>
    %30 = math.tanh %29 : vector<8x128xf32>
    %cst_14 = arith.constant 5.000000e-01 : f32
    %31 = vector.broadcast %cst_14 : f32 to vector<8x128xf32>
    %32 = arith.mulf %30, %31 : vector<8x128xf32>
    %cst_15 = arith.constant 5.000000e-01 : f32
    %33 = vector.broadcast %cst_15 : f32 to vector<8x128xf32>
    %34 = arith.addf %32, %33 : vector<8x128xf32>
    %35 = vector.extract_strided_slice %34 {offsets = [0, 0], sizes = [8, 32], strides = [1, 1]} : vector<8x128xf32> to vector<8x32xf32>
    %36 = vector.extract_strided_slice %34 {offsets = [0, 32], sizes = [8, 32], strides = [1, 1]} : vector<8x128xf32> to vector<8x32xf32>
    %37 = vector.extract_strided_slice %30 {offsets = [0, 64], sizes = [8, 32], strides = [1, 1]} : vector<8x128xf32> to vector<8x32xf32>
    %38 = vector.extract_strided_slice %34 {offsets = [0, 96], sizes = [8, 32], strides = [1, 1]} : vector<8x128xf32> to vector<8x32xf32>
    %39 = arith.mulf %36, %6 : vector<8x32xf32>
    %40 = arith.mulf %35, %37 : vector<8x32xf32>
    %41 = arith.addf %39, %40 : vector<8x32xf32>
    %42 = math.tanh %41 : vector<8x32xf32>
    %43 = arith.mulf %38, %42 : vector<8x32xf32>
    %c1_i32 = arith.constant 1 : i32
    %cst_16 = arith.constant dense<0.000000e+00> : vector<8x128xf32>
    %44 = tpu.matmul %43, %2, %cst_16 {dimension_numbers = #tpu.dot_dimension_numbers<[1], [0], [0], [1], [0, 0, 1, 1], [], []>} : vector<8x32xf32>, vector<32x128xf32>, vector<8x128xf32> -> vector<8x128xf32>
    %45 = arith.index_cast %c1_i32 : i32 to index
    %c0_17 = arith.constant 0 : index
    %c0_18 = arith.constant 0 : index
    %46 = vector.load %arg1[%45, %c0_17, %c0_18] : memref<8x8x128xf32, #tpu.memory_space<vmem>>, vector<1x8x128xf32>
    %47 = vector.shape_cast %46 : vector<1x8x128xf32> to vector<8x128xf32>
    %cst_19 = arith.constant dense<0.000000e+00> : vector<8x128xf32>
    %48 = tpu.matmul %26, %0, %cst_19 {dimension_numbers = #tpu.dot_dimension_numbers<[1], [0], [0], [1], [0, 0, 1, 1], [], []>} : vector<8x32xf32>, vector<32x128xf32>, vector<8x128xf32> -> vector<8x128xf32>
    %49 = arith.addf %47, %48 : vector<8x128xf32>
    %50 = math.tanh %49 : vector<8x128xf32>
    %cst_20 = arith.constant 5.000000e-01 : f32
    %51 = vector.broadcast %cst_20 : f32 to vector<8x128xf32>
    %52 = arith.mulf %50, %51 : vector<8x128xf32>
    %cst_21 = arith.constant 5.000000e-01 : f32
    %53 = vector.broadcast %cst_21 : f32 to vector<8x128xf32>
    %54 = arith.addf %52, %53 : vector<8x128xf32>
    %55 = vector.extract_strided_slice %54 {offsets = [0, 0], sizes = [8, 32], strides = [1, 1]} : vector<8x128xf32> to vector<8x32xf32>
    %56 = vector.extract_strided_slice %54 {offsets = [0, 32], sizes = [8, 32], strides = [1, 1]} : vector<8x128xf32> to vector<8x32xf32>
    %57 = vector.extract_strided_slice %50 {offsets = [0, 64], sizes = [8, 32], strides = [1, 1]} : vector<8x128xf32> to vector<8x32xf32>
    %58 = vector.extract_strided_slice %54 {offsets = [0, 96], sizes = [8, 32], strides = [1, 1]} : vector<8x128xf32> to vector<8x32xf32>
    %59 = arith.mulf %56, %24 : vector<8x32xf32>
    %60 = arith.mulf %55, %57 : vector<8x32xf32>
    %61 = arith.addf %59, %60 : vector<8x32xf32>
    %62 = math.tanh %61 : vector<8x32xf32>
    %63 = arith.mulf %58, %62 : vector<8x32xf32>
    %64 = arith.addf %44, %5 : vector<8x128xf32>
    %cst_22 = arith.constant dense<0.000000e+00> : vector<8x128xf32>
    %65 = tpu.matmul %63, %1, %cst_22 {dimension_numbers = #tpu.dot_dimension_numbers<[1], [0], [0], [1], [0, 0, 1, 1], [], []>} : vector<8x32xf32>, vector<32x128xf32>, vector<8x128xf32> -> vector<8x128xf32>
    %66 = arith.addf %64, %65 : vector<8x128xf32>
    %67 = math.tanh %66 : vector<8x128xf32>
    %cst_23 = arith.constant 5.000000e-01 : f32
    %68 = vector.broadcast %cst_23 : f32 to vector<8x128xf32>
    %69 = arith.mulf %67, %68 : vector<8x128xf32>
    %cst_24 = arith.constant 5.000000e-01 : f32
    %70 = vector.broadcast %cst_24 : f32 to vector<8x128xf32>
    %71 = arith.addf %69, %70 : vector<8x128xf32>
    %72 = vector.extract_strided_slice %71 {offsets = [0, 0], sizes = [8, 32], strides = [1, 1]} : vector<8x128xf32> to vector<8x32xf32>
    %73 = vector.extract_strided_slice %71 {offsets = [0, 32], sizes = [8, 32], strides = [1, 1]} : vector<8x128xf32> to vector<8x32xf32>
    %74 = vector.extract_strided_slice %67 {offsets = [0, 64], sizes = [8, 32], strides = [1, 1]} : vector<8x128xf32> to vector<8x32xf32>
    %75 = vector.extract_strided_slice %71 {offsets = [0, 96], sizes = [8, 32], strides = [1, 1]} : vector<8x128xf32> to vector<8x32xf32>
    %76 = arith.mulf %73, %41 : vector<8x32xf32>
    %77 = arith.mulf %72, %74 : vector<8x32xf32>
    %78 = arith.addf %76, %77 : vector<8x32xf32>
    %79 = math.tanh %78 : vector<8x32xf32>
    %80 = arith.mulf %75, %79 : vector<8x32xf32>
    %c2_i32 = arith.constant 2 : i32
    %cst_25 = arith.constant dense<0.000000e+00> : vector<8x128xf32>
    %81 = tpu.matmul %80, %2, %cst_25 {dimension_numbers = #tpu.dot_dimension_numbers<[1], [0], [0], [1], [0, 0, 1, 1], [], []>} : vector<8x32xf32>, vector<32x128xf32>, vector<8x128xf32> -> vector<8x128xf32>
    %82 = arith.index_cast %c2_i32 : i32 to index
    %c0_26 = arith.constant 0 : index
    %c0_27 = arith.constant 0 : index
    %83 = vector.load %arg1[%82, %c0_26, %c0_27] : memref<8x8x128xf32, #tpu.memory_space<vmem>>, vector<1x8x128xf32>
    %84 = vector.shape_cast %83 : vector<1x8x128xf32> to vector<8x128xf32>
    %cst_28 = arith.constant dense<0.000000e+00> : vector<8x128xf32>
    %85 = tpu.matmul %63, %0, %cst_28 {dimension_numbers = #tpu.dot_dimension_numbers<[1], [0], [0], [1], [0, 0, 1, 1], [], []>} : vector<8x32xf32>, vector<32x128xf32>, vector<8x128xf32> -> vector<8x128xf32>
    %86 = arith.addf %84, %85 : vector<8x128xf32>
    %87 = math.tanh %86 : vector<8x128xf32>
    %cst_29 = arith.constant 5.000000e-01 : f32
    %88 = vector.broadcast %cst_29 : f32 to vector<8x128xf32>
    %89 = arith.mulf %87, %88 : vector<8x128xf32>
    %cst_30 = arith.constant 5.000000e-01 : f32
    %90 = vector.broadcast %cst_30 : f32 to vector<8x128xf32>
    %91 = arith.addf %89, %90 : vector<8x128xf32>
    %92 = vector.extract_strided_slice %91 {offsets = [0, 0], sizes = [8, 32], strides = [1, 1]} : vector<8x128xf32> to vector<8x32xf32>
    %93 = vector.extract_strided_slice %91 {offsets = [0, 32], sizes = [8, 32], strides = [1, 1]} : vector<8x128xf32> to vector<8x32xf32>
    %94 = vector.extract_strided_slice %87 {offsets = [0, 64], sizes = [8, 32], strides = [1, 1]} : vector<8x128xf32> to vector<8x32xf32>
    %95 = vector.extract_strided_slice %91 {offsets = [0, 96], sizes = [8, 32], strides = [1, 1]} : vector<8x128xf32> to vector<8x32xf32>
    %96 = arith.mulf %93, %61 : vector<8x32xf32>
    %97 = arith.mulf %92, %94 : vector<8x32xf32>
    %98 = arith.addf %96, %97 : vector<8x32xf32>
    %99 = math.tanh %98 : vector<8x32xf32>
    %100 = arith.mulf %95, %99 : vector<8x32xf32>
    %101 = arith.addf %81, %5 : vector<8x128xf32>
    %cst_31 = arith.constant dense<0.000000e+00> : vector<8x128xf32>
    %102 = tpu.matmul %100, %1, %cst_31 {dimension_numbers = #tpu.dot_dimension_numbers<[1], [0], [0], [1], [0, 0, 1, 1], [], []>} : vector<8x32xf32>, vector<32x128xf32>, vector<8x128xf32> -> vector<8x128xf32>
    %103 = arith.addf %101, %102 : vector<8x128xf32>
    %104 = math.tanh %103 : vector<8x128xf32>
    %cst_32 = arith.constant 5.000000e-01 : f32
    %105 = vector.broadcast %cst_32 : f32 to vector<8x128xf32>
    %106 = arith.mulf %104, %105 : vector<8x128xf32>
    %cst_33 = arith.constant 5.000000e-01 : f32
    %107 = vector.broadcast %cst_33 : f32 to vector<8x128xf32>
    %108 = arith.addf %106, %107 : vector<8x128xf32>
    %109 = vector.extract_strided_slice %108 {offsets = [0, 0], sizes = [8, 32], strides = [1, 1]} : vector<8x128xf32> to vector<8x32xf32>
    %110 = vector.extract_strided_slice %108 {offsets = [0, 32], sizes = [8, 32], strides = [1, 1]} : vector<8x128xf32> to vector<8x32xf32>
    %111 = vector.extract_strided_slice %104 {offsets = [0, 64], sizes = [8, 32], strides = [1, 1]} : vector<8x128xf32> to vector<8x32xf32>
    %112 = vector.extract_strided_slice %108 {offsets = [0, 96], sizes = [8, 32], strides = [1, 1]} : vector<8x128xf32> to vector<8x32xf32>
    %113 = arith.mulf %110, %78 : vector<8x32xf32>
    %114 = arith.mulf %109, %111 : vector<8x32xf32>
    %115 = arith.addf %113, %114 : vector<8x32xf32>
    %116 = math.tanh %115 : vector<8x32xf32>
    %117 = arith.mulf %112, %116 : vector<8x32xf32>
    %c3_i32 = arith.constant 3 : i32
    %cst_34 = arith.constant dense<0.000000e+00> : vector<8x128xf32>
    %118 = tpu.matmul %117, %2, %cst_34 {dimension_numbers = #tpu.dot_dimension_numbers<[1], [0], [0], [1], [0, 0, 1, 1], [], []>} : vector<8x32xf32>, vector<32x128xf32>, vector<8x128xf32> -> vector<8x128xf32>
    %119 = arith.index_cast %c3_i32 : i32 to index
    %c0_35 = arith.constant 0 : index
    %c0_36 = arith.constant 0 : index
    %120 = vector.load %arg1[%119, %c0_35, %c0_36] : memref<8x8x128xf32, #tpu.memory_space<vmem>>, vector<1x8x128xf32>
    %121 = vector.shape_cast %120 : vector<1x8x128xf32> to vector<8x128xf32>
    %cst_37 = arith.constant dense<0.000000e+00> : vector<8x128xf32>
    %122 = tpu.matmul %100, %0, %cst_37 {dimension_numbers = #tpu.dot_dimension_numbers<[1], [0], [0], [1], [0, 0, 1, 1], [], []>} : vector<8x32xf32>, vector<32x128xf32>, vector<8x128xf32> -> vector<8x128xf32>
    %123 = arith.addf %121, %122 : vector<8x128xf32>
    %124 = math.tanh %123 : vector<8x128xf32>
    %cst_38 = arith.constant 5.000000e-01 : f32
    %125 = vector.broadcast %cst_38 : f32 to vector<8x128xf32>
    %126 = arith.mulf %124, %125 : vector<8x128xf32>
    %cst_39 = arith.constant 5.000000e-01 : f32
    %127 = vector.broadcast %cst_39 : f32 to vector<8x128xf32>
    %128 = arith.addf %126, %127 : vector<8x128xf32>
    %129 = vector.extract_strided_slice %128 {offsets = [0, 0], sizes = [8, 32], strides = [1, 1]} : vector<8x128xf32> to vector<8x32xf32>
    %130 = vector.extract_strided_slice %128 {offsets = [0, 32], sizes = [8, 32], strides = [1, 1]} : vector<8x128xf32> to vector<8x32xf32>
    %131 = vector.extract_strided_slice %124 {offsets = [0, 64], sizes = [8, 32], strides = [1, 1]} : vector<8x128xf32> to vector<8x32xf32>
    %132 = vector.extract_strided_slice %128 {offsets = [0, 96], sizes = [8, 32], strides = [1, 1]} : vector<8x128xf32> to vector<8x32xf32>
    %133 = arith.mulf %130, %98 : vector<8x32xf32>
    %134 = arith.mulf %129, %131 : vector<8x32xf32>
    %135 = arith.addf %133, %134 : vector<8x32xf32>
    %136 = math.tanh %135 : vector<8x32xf32>
    %137 = arith.mulf %132, %136 : vector<8x32xf32>
    %138 = arith.addf %118, %5 : vector<8x128xf32>
    %cst_40 = arith.constant dense<0.000000e+00> : vector<8x128xf32>
    %139 = tpu.matmul %137, %1, %cst_40 {dimension_numbers = #tpu.dot_dimension_numbers<[1], [0], [0], [1], [0, 0, 1, 1], [], []>} : vector<8x32xf32>, vector<32x128xf32>, vector<8x128xf32> -> vector<8x128xf32>
    %140 = arith.addf %138, %139 : vector<8x128xf32>
    %141 = math.tanh %140 : vector<8x128xf32>
    %cst_41 = arith.constant 5.000000e-01 : f32
    %142 = vector.broadcast %cst_41 : f32 to vector<8x128xf32>
    %143 = arith.mulf %141, %142 : vector<8x128xf32>
    %cst_42 = arith.constant 5.000000e-01 : f32
    %144 = vector.broadcast %cst_42 : f32 to vector<8x128xf32>
    %145 = arith.addf %143, %144 : vector<8x128xf32>
    %146 = vector.extract_strided_slice %145 {offsets = [0, 0], sizes = [8, 32], strides = [1, 1]} : vector<8x128xf32> to vector<8x32xf32>
    %147 = vector.extract_strided_slice %145 {offsets = [0, 32], sizes = [8, 32], strides = [1, 1]} : vector<8x128xf32> to vector<8x32xf32>
    %148 = vector.extract_strided_slice %141 {offsets = [0, 64], sizes = [8, 32], strides = [1, 1]} : vector<8x128xf32> to vector<8x32xf32>
    %149 = vector.extract_strided_slice %145 {offsets = [0, 96], sizes = [8, 32], strides = [1, 1]} : vector<8x128xf32> to vector<8x32xf32>
    %150 = arith.mulf %147, %115 : vector<8x32xf32>
    %151 = arith.mulf %146, %148 : vector<8x32xf32>
    %152 = arith.addf %150, %151 : vector<8x32xf32>
    %153 = math.tanh %152 : vector<8x32xf32>
    %154 = arith.mulf %149, %153 : vector<8x32xf32>
    %c4_i32 = arith.constant 4 : i32
    %cst_43 = arith.constant dense<0.000000e+00> : vector<8x128xf32>
    %155 = tpu.matmul %154, %2, %cst_43 {dimension_numbers = #tpu.dot_dimension_numbers<[1], [0], [0], [1], [0, 0, 1, 1], [], []>} : vector<8x32xf32>, vector<32x128xf32>, vector<8x128xf32> -> vector<8x128xf32>
    %156 = arith.index_cast %c4_i32 : i32 to index
    %c0_44 = arith.constant 0 : index
    %c0_45 = arith.constant 0 : index
    %157 = vector.load %arg1[%156, %c0_44, %c0_45] : memref<8x8x128xf32, #tpu.memory_space<vmem>>, vector<1x8x128xf32>
    %158 = vector.shape_cast %157 : vector<1x8x128xf32> to vector<8x128xf32>
    %cst_46 = arith.constant dense<0.000000e+00> : vector<8x128xf32>
    %159 = tpu.matmul %137, %0, %cst_46 {dimension_numbers = #tpu.dot_dimension_numbers<[1], [0], [0], [1], [0, 0, 1, 1], [], []>} : vector<8x32xf32>, vector<32x128xf32>, vector<8x128xf32> -> vector<8x128xf32>
    %160 = arith.addf %158, %159 : vector<8x128xf32>
    %161 = math.tanh %160 : vector<8x128xf32>
    %cst_47 = arith.constant 5.000000e-01 : f32
    %162 = vector.broadcast %cst_47 : f32 to vector<8x128xf32>
    %163 = arith.mulf %161, %162 : vector<8x128xf32>
    %cst_48 = arith.constant 5.000000e-01 : f32
    %164 = vector.broadcast %cst_48 : f32 to vector<8x128xf32>
    %165 = arith.addf %163, %164 : vector<8x128xf32>
    %166 = vector.extract_strided_slice %165 {offsets = [0, 0], sizes = [8, 32], strides = [1, 1]} : vector<8x128xf32> to vector<8x32xf32>
    %167 = vector.extract_strided_slice %165 {offsets = [0, 32], sizes = [8, 32], strides = [1, 1]} : vector<8x128xf32> to vector<8x32xf32>
    %168 = vector.extract_strided_slice %161 {offsets = [0, 64], sizes = [8, 32], strides = [1, 1]} : vector<8x128xf32> to vector<8x32xf32>
    %169 = vector.extract_strided_slice %165 {offsets = [0, 96], sizes = [8, 32], strides = [1, 1]} : vector<8x128xf32> to vector<8x32xf32>
    %170 = arith.mulf %167, %135 : vector<8x32xf32>
    %171 = arith.mulf %166, %168 : vector<8x32xf32>
    %172 = arith.addf %170, %171 : vector<8x32xf32>
    %173 = math.tanh %172 : vector<8x32xf32>
    %174 = arith.mulf %169, %173 : vector<8x32xf32>
    %175 = arith.addf %155, %5 : vector<8x128xf32>
    %cst_49 = arith.constant dense<0.000000e+00> : vector<8x128xf32>
    %176 = tpu.matmul %174, %1, %cst_49 {dimension_numbers = #tpu.dot_dimension_numbers<[1], [0], [0], [1], [0, 0, 1, 1], [], []>} : vector<8x32xf32>, vector<32x128xf32>, vector<8x128xf32> -> vector<8x128xf32>
    %177 = arith.addf %175, %176 : vector<8x128xf32>
    %178 = math.tanh %177 : vector<8x128xf32>
    %cst_50 = arith.constant 5.000000e-01 : f32
    %179 = vector.broadcast %cst_50 : f32 to vector<8x128xf32>
    %180 = arith.mulf %178, %179 : vector<8x128xf32>
    %cst_51 = arith.constant 5.000000e-01 : f32
    %181 = vector.broadcast %cst_51 : f32 to vector<8x128xf32>
    %182 = arith.addf %180, %181 : vector<8x128xf32>
    %183 = vector.extract_strided_slice %182 {offsets = [0, 0], sizes = [8, 32], strides = [1, 1]} : vector<8x128xf32> to vector<8x32xf32>
    %184 = vector.extract_strided_slice %182 {offsets = [0, 32], sizes = [8, 32], strides = [1, 1]} : vector<8x128xf32> to vector<8x32xf32>
    %185 = vector.extract_strided_slice %178 {offsets = [0, 64], sizes = [8, 32], strides = [1, 1]} : vector<8x128xf32> to vector<8x32xf32>
    %186 = vector.extract_strided_slice %182 {offsets = [0, 96], sizes = [8, 32], strides = [1, 1]} : vector<8x128xf32> to vector<8x32xf32>
    %187 = arith.mulf %184, %152 : vector<8x32xf32>
    %188 = arith.mulf %183, %185 : vector<8x32xf32>
    %189 = arith.addf %187, %188 : vector<8x32xf32>
    %190 = math.tanh %189 : vector<8x32xf32>
    %191 = arith.mulf %186, %190 : vector<8x32xf32>
    %c5_i32 = arith.constant 5 : i32
    %cst_52 = arith.constant dense<0.000000e+00> : vector<8x128xf32>
    %192 = tpu.matmul %191, %2, %cst_52 {dimension_numbers = #tpu.dot_dimension_numbers<[1], [0], [0], [1], [0, 0, 1, 1], [], []>} : vector<8x32xf32>, vector<32x128xf32>, vector<8x128xf32> -> vector<8x128xf32>
    %193 = arith.index_cast %c5_i32 : i32 to index
    %c0_53 = arith.constant 0 : index
    %c0_54 = arith.constant 0 : index
    %194 = vector.load %arg1[%193, %c0_53, %c0_54] : memref<8x8x128xf32, #tpu.memory_space<vmem>>, vector<1x8x128xf32>
    %195 = vector.shape_cast %194 : vector<1x8x128xf32> to vector<8x128xf32>
    %cst_55 = arith.constant dense<0.000000e+00> : vector<8x128xf32>
    %196 = tpu.matmul %174, %0, %cst_55 {dimension_numbers = #tpu.dot_dimension_numbers<[1], [0], [0], [1], [0, 0, 1, 1], [], []>} : vector<8x32xf32>, vector<32x128xf32>, vector<8x128xf32> -> vector<8x128xf32>
    %197 = arith.addf %195, %196 : vector<8x128xf32>
    %198 = math.tanh %197 : vector<8x128xf32>
    %cst_56 = arith.constant 5.000000e-01 : f32
    %199 = vector.broadcast %cst_56 : f32 to vector<8x128xf32>
    %200 = arith.mulf %198, %199 : vector<8x128xf32>
    %cst_57 = arith.constant 5.000000e-01 : f32
    %201 = vector.broadcast %cst_57 : f32 to vector<8x128xf32>
    %202 = arith.addf %200, %201 : vector<8x128xf32>
    %203 = vector.extract_strided_slice %202 {offsets = [0, 0], sizes = [8, 32], strides = [1, 1]} : vector<8x128xf32> to vector<8x32xf32>
    %204 = vector.extract_strided_slice %202 {offsets = [0, 32], sizes = [8, 32], strides = [1, 1]} : vector<8x128xf32> to vector<8x32xf32>
    %205 = vector.extract_strided_slice %198 {offsets = [0, 64], sizes = [8, 32], strides = [1, 1]} : vector<8x128xf32> to vector<8x32xf32>
    %206 = vector.extract_strided_slice %202 {offsets = [0, 96], sizes = [8, 32], strides = [1, 1]} : vector<8x128xf32> to vector<8x32xf32>
    %207 = arith.mulf %204, %172 : vector<8x32xf32>
    %208 = arith.mulf %203, %205 : vector<8x32xf32>
    %209 = arith.addf %207, %208 : vector<8x32xf32>
    %210 = math.tanh %209 : vector<8x32xf32>
    %211 = arith.mulf %206, %210 : vector<8x32xf32>
    %212 = arith.addf %192, %5 : vector<8x128xf32>
    %cst_58 = arith.constant dense<0.000000e+00> : vector<8x128xf32>
    %213 = tpu.matmul %211, %1, %cst_58 {dimension_numbers = #tpu.dot_dimension_numbers<[1], [0], [0], [1], [0, 0, 1, 1], [], []>} : vector<8x32xf32>, vector<32x128xf32>, vector<8x128xf32> -> vector<8x128xf32>
    %214 = arith.addf %212, %213 : vector<8x128xf32>
    %215 = math.tanh %214 : vector<8x128xf32>
    %cst_59 = arith.constant 5.000000e-01 : f32
    %216 = vector.broadcast %cst_59 : f32 to vector<8x128xf32>
    %217 = arith.mulf %215, %216 : vector<8x128xf32>
    %cst_60 = arith.constant 5.000000e-01 : f32
    %218 = vector.broadcast %cst_60 : f32 to vector<8x128xf32>
    %219 = arith.addf %217, %218 : vector<8x128xf32>
    %220 = vector.extract_strided_slice %219 {offsets = [0, 0], sizes = [8, 32], strides = [1, 1]} : vector<8x128xf32> to vector<8x32xf32>
    %221 = vector.extract_strided_slice %219 {offsets = [0, 32], sizes = [8, 32], strides = [1, 1]} : vector<8x128xf32> to vector<8x32xf32>
    %222 = vector.extract_strided_slice %215 {offsets = [0, 64], sizes = [8, 32], strides = [1, 1]} : vector<8x128xf32> to vector<8x32xf32>
    %223 = vector.extract_strided_slice %219 {offsets = [0, 96], sizes = [8, 32], strides = [1, 1]} : vector<8x128xf32> to vector<8x32xf32>
    %224 = arith.mulf %221, %189 : vector<8x32xf32>
    %225 = arith.mulf %220, %222 : vector<8x32xf32>
    %226 = arith.addf %224, %225 : vector<8x32xf32>
    %227 = math.tanh %226 : vector<8x32xf32>
    %228 = arith.mulf %223, %227 : vector<8x32xf32>
    %c6_i32 = arith.constant 6 : i32
    %cst_61 = arith.constant dense<0.000000e+00> : vector<8x128xf32>
    %229 = tpu.matmul %228, %2, %cst_61 {dimension_numbers = #tpu.dot_dimension_numbers<[1], [0], [0], [1], [0, 0, 1, 1], [], []>} : vector<8x32xf32>, vector<32x128xf32>, vector<8x128xf32> -> vector<8x128xf32>
    %230 = arith.index_cast %c6_i32 : i32 to index
    %c0_62 = arith.constant 0 : index
    %c0_63 = arith.constant 0 : index
    %231 = vector.load %arg1[%230, %c0_62, %c0_63] : memref<8x8x128xf32, #tpu.memory_space<vmem>>, vector<1x8x128xf32>
    %232 = vector.shape_cast %231 : vector<1x8x128xf32> to vector<8x128xf32>
    %cst_64 = arith.constant dense<0.000000e+00> : vector<8x128xf32>
    %233 = tpu.matmul %211, %0, %cst_64 {dimension_numbers = #tpu.dot_dimension_numbers<[1], [0], [0], [1], [0, 0, 1, 1], [], []>} : vector<8x32xf32>, vector<32x128xf32>, vector<8x128xf32> -> vector<8x128xf32>
    %234 = arith.addf %232, %233 : vector<8x128xf32>
    %235 = math.tanh %234 : vector<8x128xf32>
    %cst_65 = arith.constant 5.000000e-01 : f32
    %236 = vector.broadcast %cst_65 : f32 to vector<8x128xf32>
    %237 = arith.mulf %235, %236 : vector<8x128xf32>
    %cst_66 = arith.constant 5.000000e-01 : f32
    %238 = vector.broadcast %cst_66 : f32 to vector<8x128xf32>
    %239 = arith.addf %237, %238 : vector<8x128xf32>
    %240 = vector.extract_strided_slice %239 {offsets = [0, 0], sizes = [8, 32], strides = [1, 1]} : vector<8x128xf32> to vector<8x32xf32>
    %241 = vector.extract_strided_slice %239 {offsets = [0, 32], sizes = [8, 32], strides = [1, 1]} : vector<8x128xf32> to vector<8x32xf32>
    %242 = vector.extract_strided_slice %235 {offsets = [0, 64], sizes = [8, 32], strides = [1, 1]} : vector<8x128xf32> to vector<8x32xf32>
    %243 = vector.extract_strided_slice %239 {offsets = [0, 96], sizes = [8, 32], strides = [1, 1]} : vector<8x128xf32> to vector<8x32xf32>
    %244 = arith.mulf %241, %209 : vector<8x32xf32>
    %245 = arith.mulf %240, %242 : vector<8x32xf32>
    %246 = arith.addf %244, %245 : vector<8x32xf32>
    %247 = math.tanh %246 : vector<8x32xf32>
    %248 = arith.mulf %243, %247 : vector<8x32xf32>
    %249 = arith.addf %229, %5 : vector<8x128xf32>
    %cst_67 = arith.constant dense<0.000000e+00> : vector<8x128xf32>
    %250 = tpu.matmul %248, %1, %cst_67 {dimension_numbers = #tpu.dot_dimension_numbers<[1], [0], [0], [1], [0, 0, 1, 1], [], []>} : vector<8x32xf32>, vector<32x128xf32>, vector<8x128xf32> -> vector<8x128xf32>
    %251 = arith.addf %249, %250 : vector<8x128xf32>
    %252 = math.tanh %251 : vector<8x128xf32>
    %cst_68 = arith.constant 5.000000e-01 : f32
    %253 = vector.broadcast %cst_68 : f32 to vector<8x128xf32>
    %254 = arith.mulf %252, %253 : vector<8x128xf32>
    %cst_69 = arith.constant 5.000000e-01 : f32
    %255 = vector.broadcast %cst_69 : f32 to vector<8x128xf32>
    %256 = arith.addf %254, %255 : vector<8x128xf32>
    %257 = vector.extract_strided_slice %256 {offsets = [0, 0], sizes = [8, 32], strides = [1, 1]} : vector<8x128xf32> to vector<8x32xf32>
    %258 = vector.extract_strided_slice %256 {offsets = [0, 32], sizes = [8, 32], strides = [1, 1]} : vector<8x128xf32> to vector<8x32xf32>
    %259 = vector.extract_strided_slice %252 {offsets = [0, 64], sizes = [8, 32], strides = [1, 1]} : vector<8x128xf32> to vector<8x32xf32>
    %260 = vector.extract_strided_slice %256 {offsets = [0, 96], sizes = [8, 32], strides = [1, 1]} : vector<8x128xf32> to vector<8x32xf32>
    %261 = arith.mulf %258, %226 : vector<8x32xf32>
    %262 = arith.mulf %257, %259 : vector<8x32xf32>
    %263 = arith.addf %261, %262 : vector<8x32xf32>
    %264 = math.tanh %263 : vector<8x32xf32>
    %265 = arith.mulf %260, %264 : vector<8x32xf32>
    %c7_i32 = arith.constant 7 : i32
    %cst_70 = arith.constant dense<0.000000e+00> : vector<8x128xf32>
    %266 = tpu.matmul %265, %2, %cst_70 {dimension_numbers = #tpu.dot_dimension_numbers<[1], [0], [0], [1], [0, 0, 1, 1], [], []>} : vector<8x32xf32>, vector<32x128xf32>, vector<8x128xf32> -> vector<8x128xf32>
    %267 = arith.index_cast %c7_i32 : i32 to index
    %c0_71 = arith.constant 0 : index
    %c0_72 = arith.constant 0 : index
    %268 = vector.load %arg1[%267, %c0_71, %c0_72] : memref<8x8x128xf32, #tpu.memory_space<vmem>>, vector<1x8x128xf32>
    %269 = vector.shape_cast %268 : vector<1x8x128xf32> to vector<8x128xf32>
    %cst_73 = arith.constant dense<0.000000e+00> : vector<8x128xf32>
    %270 = tpu.matmul %248, %0, %cst_73 {dimension_numbers = #tpu.dot_dimension_numbers<[1], [0], [0], [1], [0, 0, 1, 1], [], []>} : vector<8x32xf32>, vector<32x128xf32>, vector<8x128xf32> -> vector<8x128xf32>
    %271 = arith.addf %269, %270 : vector<8x128xf32>
    %272 = math.tanh %271 : vector<8x128xf32>
    %cst_74 = arith.constant 5.000000e-01 : f32
    %273 = vector.broadcast %cst_74 : f32 to vector<8x128xf32>
    %274 = arith.mulf %272, %273 : vector<8x128xf32>
    %cst_75 = arith.constant 5.000000e-01 : f32
    %275 = vector.broadcast %cst_75 : f32 to vector<8x128xf32>
    %276 = arith.addf %274, %275 : vector<8x128xf32>
    %277 = vector.extract_strided_slice %276 {offsets = [0, 0], sizes = [8, 32], strides = [1, 1]} : vector<8x128xf32> to vector<8x32xf32>
    %278 = vector.extract_strided_slice %276 {offsets = [0, 32], sizes = [8, 32], strides = [1, 1]} : vector<8x128xf32> to vector<8x32xf32>
    %279 = vector.extract_strided_slice %272 {offsets = [0, 64], sizes = [8, 32], strides = [1, 1]} : vector<8x128xf32> to vector<8x32xf32>
    %280 = vector.extract_strided_slice %276 {offsets = [0, 96], sizes = [8, 32], strides = [1, 1]} : vector<8x128xf32> to vector<8x32xf32>
    %281 = arith.mulf %278, %246 : vector<8x32xf32>
    %282 = arith.mulf %277, %279 : vector<8x32xf32>
    %283 = arith.addf %281, %282 : vector<8x32xf32>
    %284 = math.tanh %283 : vector<8x32xf32>
    %285 = arith.mulf %280, %284 : vector<8x32xf32>
    %286 = arith.addf %266, %5 : vector<8x128xf32>
    %cst_76 = arith.constant dense<0.000000e+00> : vector<8x128xf32>
    %287 = tpu.matmul %285, %1, %cst_76 {dimension_numbers = #tpu.dot_dimension_numbers<[1], [0], [0], [1], [0, 0, 1, 1], [], []>} : vector<8x32xf32>, vector<32x128xf32>, vector<8x128xf32> -> vector<8x128xf32>
    %288 = arith.addf %286, %287 : vector<8x128xf32>
    %289 = math.tanh %288 : vector<8x128xf32>
    %cst_77 = arith.constant 5.000000e-01 : f32
    %290 = vector.broadcast %cst_77 : f32 to vector<8x128xf32>
    %291 = arith.mulf %289, %290 : vector<8x128xf32>
    %cst_78 = arith.constant 5.000000e-01 : f32
    %292 = vector.broadcast %cst_78 : f32 to vector<8x128xf32>
    %293 = arith.addf %291, %292 : vector<8x128xf32>
    %294 = vector.extract_strided_slice %293 {offsets = [0, 0], sizes = [8, 32], strides = [1, 1]} : vector<8x128xf32> to vector<8x32xf32>
    %295 = vector.extract_strided_slice %293 {offsets = [0, 32], sizes = [8, 32], strides = [1, 1]} : vector<8x128xf32> to vector<8x32xf32>
    %296 = vector.extract_strided_slice %289 {offsets = [0, 64], sizes = [8, 32], strides = [1, 1]} : vector<8x128xf32> to vector<8x32xf32>
    %297 = vector.extract_strided_slice %293 {offsets = [0, 96], sizes = [8, 32], strides = [1, 1]} : vector<8x128xf32> to vector<8x32xf32>
    %298 = arith.mulf %295, %263 : vector<8x32xf32>
    %299 = arith.mulf %294, %296 : vector<8x32xf32>
    %300 = arith.addf %298, %299 : vector<8x32xf32>
    %301 = math.tanh %300 : vector<8x32xf32>
    %302 = arith.mulf %297, %301 : vector<8x32xf32>
    %c8_i32 = arith.constant 8 : i32
    %c0_79 = arith.constant 0 : index
    %c0_80 = arith.constant 0 : index
    %303 = vector.load %arg6[%c0_79, %c0_80] : memref<32x1xf32, #tpu.memory_space<vmem>>, vector<32x1xf32>
    %cst_81 = arith.constant dense<0.000000e+00> : vector<8x1xf32>
    %304 = tpu.matmul %302, %303, %cst_81 {dimension_numbers = #tpu.dot_dimension_numbers<[1], [0], [0], [1], [0, 0, 1, 1], [], []>} : vector<8x32xf32>, vector<32x1xf32>, vector<8x1xf32> -> vector<8x1xf32>
    %c0_82 = arith.constant 0 : index
    %c0_83 = arith.constant 0 : index
    %305 = vector.load %arg7[%c0_82, %c0_83] : memref<1x1xf32, #tpu.memory_space<vmem>>, vector<1x1xf32>
    %306 = vector.broadcast %305 : vector<1x1xf32> to vector<8x1xf32>
    %307 = arith.addf %304, %306 : vector<8x1xf32>
    %c0_84 = arith.constant 0 : index
    %c0_85 = arith.constant 0 : index
    %308 = vector.load %arg8[%c0_84, %c0_85] : memref<8x1xf32, #tpu.memory_space<vmem>>, vector<8x1xf32>
    tpu.vector_store %arg8[%c0_84, %c0_85], %307 {strides = array<i32>} : memref<8x1xf32, #tpu.memory_space<vmem>>, vector<8x1xf32>,
    return
  }
  func.func @transform_0(%arg0: i32) -> (i32, i32, i32) {
    %c0_i32 = arith.constant 0 : i32
    %c0_i32_0 = arith.constant 0 : i32
    %c0_i32_1 = arith.constant 0 : i32
    return %c0_i32, %arg0, %c0_i32_0 : i32, i32, i32
  }
  func.func @transform_1(%arg0: i32) -> (i32, i32) {
    %c0_i32 = arith.constant 0 : i32
    %c0_i32_0 = arith.constant 0 : i32
    %c0_i32_1 = arith.constant 0 : i32
    return %c0_i32, %c0_i32_0 : i32, i32
  }
  func.func @transform_2(%arg0: i32) -> (i32, i32) {
    %c0_i32 = arith.constant 0 : i32
    %c0_i32_0 = arith.constant 0 : i32
    %c0_i32_1 = arith.constant 0 : i32
    return %c0_i32, %c0_i32_0 : i32, i32
  }
  func.func @transform_3(%arg0: i32) -> (i32, i32) {
    %c0_i32 = arith.constant 0 : i32
    %c0_i32_0 = arith.constant 0 : i32
    %c0_i32_1 = arith.constant 0 : i32
    return %c0_i32, %c0_i32_0 : i32, i32
  }
  func.func @transform_4(%arg0: i32) -> (i32, i32) {
    %c0_i32 = arith.constant 0 : i32
    %c0_i32_0 = arith.constant 0 : i32
    %c0_i32_1 = arith.constant 0 : i32
    return %c0_i32, %c0_i32_0 : i32, i32
  }
  func.func @transform_5(%arg0: i32) -> (i32, i32) {
    %c0_i32 = arith.constant 0 : i32
    %c0_i32_0 = arith.constant 0 : i32
    %c0_i32_1 = arith.constant 0 : i32
    return %c0_i32, %c0_i32_0 : i32, i32
  }
  func.func @transform_6(%arg0: i32) -> (i32, i32) {
    %c0_i32 = arith.constant 0 : i32
    %c0_i32_0 = arith.constant 0 : i32
    %c0_i32_1 = arith.constant 0 : i32
    return %c0_i32, %c0_i32_0 : i32, i32
  }
  func.func @transform_7(%arg0: i32) -> (i32, i32) {
    %c0_i32 = arith.constant 0 : i32
    %c0_i32_0 = arith.constant 0 : i32
    return %arg0, %c0_i32 : i32, i32
  }
}

</mosaic_0001>

<llo_original>
// kernel: tpu_custom_call.1
$region0: #{tpu_custom_call.1}
  #allocation0 [shape = 'u32[]', space=smem, size = 0x4, offset = 0x4, fixed_abs, tag = 'smem constant byte address 0x4 - core index']
  #allocation1 [shape = 'u32[144,128]{1,0:T(1,128)}', space=vmem, size = 0x12000, scoped, tag = 'internal scratch']
  #allocation2 [shape = 'f32[1,1]{1,0:T(1,128)S(1)}', space=vmem, size = 0x200, scoped, tag = 'scoped memory for tpu_custom_call.1']
  %s0 = inlined_call_operand.hbm [shape: f32[8,8,128], index: 0, kind: input, shape index: {}]
  %s1 = inlined_call_operand.vmem [shape: f32[32,128], index: 1, kind: input, shape index: {}]
  %s2 = inlined_call_operand.hbm [shape: f32[32,128], index: 2, kind: input, shape index: {}]
  %s3 = inlined_call_operand.hbm [shape: f32[32,128], index: 3, kind: input, shape index: {}]
  %s4 = inlined_call_operand.vmem [shape: f32[1,128], index: 4, kind: input, shape index: {}]
  %s5 = inlined_call_operand.vmem [shape: f32[32,1], index: 5, kind: input, shape index: {}]
  %s6 = inlined_call_operand.<no memory space> [shape: f32[1,1], index: 6, kind: input, shape index: {}]
  %s7 = inlined_call_operand.vmem [shape: f32[8,1], index: 7, kind: output, shape index: {}]
  %s8 = sld [smem:[#allocation0]]
  $region50: #{tpu_custom_call.1} parent=0
    _
  %s10 = ssub.s32 1, %s8
  %s11 = scalar_select 0, %s10, %s8
  %v12 = vstv %s6
  %13 = vst [vmem:[#allocation2] sm:$0x1] %v12
  $region1: #{tpu_custom_call.1} parent=0
    #allocation3 [shape = 'u8[32768]{0}', space=vmem, size = 0x8000, scoped, tag = 'input window, operand 0, single buffered']
    #allocation4 [shape = 's32[1]{0}', space=sflag, size = 0x4, scoped, tag = 'scoped memory for tpu_custom_call.1']
    #allocation5 [shape = 'u8[16384]{0}', space=vmem, size = 0x4000, scoped, tag = 'input window, operand 2, single buffered']
    #allocation6 [shape = 's32[1]{0}', space=sflag, size = 0x4, scoped, tag = 'scoped memory for tpu_custom_call.1']
    #allocation7 [shape = 'u8[16384]{0}', space=vmem, size = 0x4000, scoped, tag = 'input window, operand 3, single buffered']
    %14 = vsyncpa [#allocation4], 0
    %15 = vsyncpa [#allocation6], 0
    // Predicated region
    $region2: #{tpu_custom_call.1} parent=1 // pred_check
      _
    $region3: #{tpu_custom_call.1} parent=1 // pred_check_branch
      %17 = sbr.rel (0) target = $region5
    $region4: #{tpu_custom_call.1} parent=1 // pred_region
      %s19 = ssub.s32 1024, 1024
      %20 = vsyncadd [#allocation4], %s19
      %s21 = sshll.u32 [#allocation3], 4
      %s22 = int_to_ptr.vmem [resolvable:$true] %s21
      %27 = dma.hbm_to_vmem [thread:$0]  %s0, 1024, %s22, [#allocation4], 128, 128, 8
    $region5: #{tpu_custom_call.1} parent=1 // pred_fallthru
      _
    // Predicated region
    $region6: #{tpu_custom_call.1} parent=1 // pred_check
      _
    $region7: #{tpu_custom_call.1} parent=1 // pred_check_branch
      %29 = sbr.rel (0) target = $region9
    $region8: #{tpu_custom_call.1} parent=1 // pred_region
      _
    $region9: #{tpu_custom_call.1} parent=1 // pred_fallthru
      _
    // Predicated region
    $region10: #{tpu_custom_call.1} parent=1 // pred_check
      _
    $region11: #{tpu_custom_call.1} parent=1 // pred_check_branch
      %31 = sbr.rel (0) target = $region13
    $region12: #{tpu_custom_call.1} parent=1 // pred_region
      %s33 = ssub.s32 512, 512
      %34 = vsyncadd [#allocation6], %s33
      %s35 = sshll.u32 [#allocation5], 4
      %s36 = int_to_ptr.vmem [resolvable:$true] %s35
      %41 = dma.hbm_to_vmem [thread:$0]  %s2, 512, %s36, [#allocation6], 128, 128, 8
    $region13: #{tpu_custom_call.1} parent=1 // pred_fallthru
      _
    // Predicated region
    $region14: #{tpu_custom_call.1} parent=1 // pred_check
      _
    $region15: #{tpu_custom_call.1} parent=1 // pred_check_branch
      %43 = sbr.rel (0) target = $region17
    $region16: #{tpu_custom_call.1} parent=1 // pred_region
      %s45 = ssub.s32 512, 512
      %46 = vsyncadd [#allocation6], %s45
      %s47 = sshll.u32 [#allocation7], 4
      %s48 = int_to_ptr.vmem [resolvable:$true] %s47
      %53 = dma.hbm_to_vmem [thread:$0]  %s3, 512, %s48, [#allocation6], 128, 128, 8
    $region17: #{tpu_custom_call.1} parent=1 // pred_fallthru
      _
    // Predicated region
    $region18: #{tpu_custom_call.1} parent=1 // pred_check
      _
    $region19: #{tpu_custom_call.1} parent=1 // pred_check_branch
      %55 = sbr.rel (0) target = $region21
    $region20: #{tpu_custom_call.1} parent=1 // pred_region
      _
    $region21: #{tpu_custom_call.1} parent=1 // pred_fallthru
      _
    // Predicated region
    $region22: #{tpu_custom_call.1} parent=1 // pred_check
      _
    $region23: #{tpu_custom_call.1} parent=1 // pred_check_branch
      %57 = sbr.rel (0) target = $region25
    $region24: #{tpu_custom_call.1} parent=1 // pred_region
      _
    $region25: #{tpu_custom_call.1} parent=1 // pred_fallthru
      _
    // Predicated region
    $region26: #{tpu_custom_call.1} parent=1 // pred_check
      _
    $region27: #{tpu_custom_call.1} parent=1 // pred_check_branch
      %59 = sbr.rel (0) target = $region29
    $region28: #{tpu_custom_call.1} parent=1 // pred_region
      _
    $region29: #{tpu_custom_call.1} parent=1 // pred_fallthru
      _
    // Predicated region
    $region30: #{tpu_custom_call.1} parent=1 // pred_check
      _
    $region31: #{tpu_custom_call.1} parent=1 // pred_check_branch
      %61 = sbr.rel (0) target = $region33
    $region32: #{tpu_custom_call.1} parent=1 // pred_region
      %62 = dma.done [#allocation4], 1024
    $region33: #{tpu_custom_call.1} parent=1 // pred_fallthru
      _
    // Predicated region
    $region34: #{tpu_custom_call.1} parent=1 // pred_check
      _
    $region35: #{tpu_custom_call.1} parent=1 // pred_check_branch
      %64 = sbr.rel (0) target = $region37
    $region36: #{tpu_custom_call.1} parent=1 // pred_region
      %65 = dma.done [#allocation6], 512
    $region37: #{tpu_custom_call.1} parent=1 // pred_fallthru
      _
    // Predicated region
    $region38: #{tpu_custom_call.1} parent=1 // pred_check
      _
    $region39: #{tpu_custom_call.1} parent=1 // pred_check_branch
      %67 = sbr.rel (0) target = $region41
    $region40: #{tpu_custom_call.1} parent=1 // pred_region
      %68 = dma.done [#allocation6], 512
    $region41: #{tpu_custom_call.1} parent=1 // pred_fallthru
      _
    %v69 = vld [vmem:[%s1] sm:$0xff]
    %v70 = vld [vmem:[%s1 + $0x8] sm:$0xff]
    %v71 = vld [vmem:[%s1 + $0x10] sm:$0xff]
    %v72 = vld [vmem:[%s1 + $0x18] sm:$0xff]
    %v73 = vld [vmem:[#allocation5] sm:$0xff]
    %v74 = vld [vmem:[#allocation5 + $0x8] sm:$0xff]
    %v75 = vld [vmem:[#allocation5 + $0x10] sm:$0xff]
    %v76 = vld [vmem:[#allocation5 + $0x18] sm:$0xff]
    %v77 = vld [vmem:[#allocation7] sm:$0xff]
    %v78 = vld [vmem:[#allocation7 + $0x8] sm:$0xff]
    %v79 = vld [vmem:[#allocation7 + $0x10] sm:$0xff]
    %v80 = vld [vmem:[#allocation7 + $0x18] sm:$0xff]
    %v81 = vld [vmem:[%s4] sm:$0x1]
    %v83 = vlaneseq
    %v84 = vshrl.u32 %v83, 7
    %v85 = vsub.s32 0, %v84
    %v86 = vrot.slane %v81, %v85
    %v88 = vld [vmem:[#allocation3] sm:$0xff]
    %vm89 = vcmask 261120
    %v91 = vsel %vm89, 0.0, 0
    %93 = vmatprep.subr.mxu0 0.0
    %94 = vmatpush1.msra.mxu0 %v69
    %95 = vmatprep.subr.mxu0 0.0
    %96 = vmatpush1.msra.mxu0 %v70
    %97 = vmatprep.subr.mxu0 0.0
    %98 = vmatpush1.msra.mxu0 %v71
    %99 = vmatprep.subr.mxu0 0.0
    %100 = vmatpush1.msra.mxu0 %v72
    %101 = vmatprep.subr.mxu0 0.0
    %102 = vmatpush1.msra.mxu0 0.0
    %103 = vmatprep.subr.mxu0 0.0
    %104 = vmatpush1.msra.mxu0 0.0
    %105 = vmatprep.subr.mxu0 0.0
    %106 = vmatpush1.msra.mxu0 0.0
    %107 = vmatprep.subr.mxu0 0.0
    %108 = vmatpush1.msra.mxu0 0.0
    %109 = vmatprep.subr.mxu0 0.0
    %110 = vmatpush1.msra.mxu0 0.0
    %111 = vmatprep.subr.mxu0 0.0
    %112 = vmatpush1.msra.mxu0 0.0
    %113 = vmatprep.subr.mxu0 0.0
    %114 = vmatpush1.msra.mxu0 0.0
    %115 = vmatprep.subr.mxu0 0.0
    %116 = vmatpush1.msra.mxu0 0.0
    %117 = vmatprep.subr.mxu0 0.0
    %118 = vmatpush1.msra.mxu0 0.0
    %119 = vmatprep.subr.mxu0 0.0
    %120 = vmatpush1.msra.mxu0 0.0
    %121 = vmatprep.subr.mxu0 0.0
    %122 = vmatpush1.msra.mxu0 0.0
    %123 = vmatprep.subr.mxu0 0.0
    %124 = vmatpush1.msra.mxu0 0.0
    %125 = vmatprep.subr.mxu0 0.0
    %126 = vmatpush1.msra.mxu0 0.0
    %127 = vmatprep.subr.mxu0 0.0
    %128 = vmatpush1.msra.mxu0 0.0
    %129 = vmatprep.subr.mxu0 0.0
    %130 = vmatpush1.msra.mxu0 0.0
    %131 = vmatprep.subr.mxu0 0.0
    %132 = vmatpush1.msra.mxu0 0.0
    %133 = vmatprep.subr.mxu0 0.0
    %134 = vmatpush1.msra.mxu0 0.0
    %135 = vmatprep.subr.mxu0 0.0
    %136 = vmatpush1.msra.mxu0 0.0
    %137 = vmatprep.subr.mxu0 0.0
    %138 = vmatpush1.msra.mxu0 0.0
    %139 = vmatprep.subr.mxu0 0.0
    %140 = vmatpush1.msra.mxu0 0.0
    %141 = vmatprep.subr.mxu0 0.0
    %142 = vmatpush1.msra.mxu0 0.0
    %143 = vmatprep.subr.mxu0 0.0
    %144 = vmatpush1.msra.mxu0 0.0
    %145 = vmatprep.subr.mxu0 0.0
    %146 = vmatpush1.msra.mxu0 0.0
    %147 = vmatprep.subr.mxu0 0.0
    %148 = vmatpush1.msra.mxu0 0.0
    %149 = vmatprep.subr.mxu0 0.0
    %150 = vmatpush1.msra.mxu0 0.0
    %151 = vmatprep.subr.mxu0 0.0
    %152 = vmatpush1.msra.mxu0 0.0
    %153 = vmatprep.subr.mxu0 0.0
    %154 = vmatpush1.msra.mxu0 0.0
    %155 = vmatprep.subr.mxu0 0.0
    %156 = vmatpush1.msra.mxu0 0.0
    %157 = vmatprep.mubr.f32.mxu0 0.0
    %158 = vmatmul.mubr.f32.gmra.mrb[0].mxu0 %v91
    %v159 = vpop.f32.mrb[0].mxu0
    %v160 = vadd.f32 0.0, %v159
    %v161 = vpop.f32.mrb[0].mxu0
    %162 = vdwg.mxu0
    %v163 = vadd.f32 %v88, %v160
    %v164 = vtanh.pop %v163
    %v165 = vmul.f32 %v164, 0.5
    %v166 = vadd.f32 %v165, 0.5
    %v167 = vmul.f32 %v166, 0.0
    %169 = vrot.lane.b32.xlu0 %v164, 64
    %v170 = vpop.permute.xlu0 %169
    %v172 = vmul.f32 %v166, %v170
    %174 = vrot.lane.b32.xlu0 %v172, 32
    %v175 = vpop.permute.xlu0 %174
    %v177 = vadd.f32 %v167, %v175
    %v178 = vtanh.pop %v177
    %180 = vrot.lane.b32.xlu0 %v178, 64
    %v181 = vpop.permute.xlu0 %180
    %v183 = vmul.f32 %v166, %v181
    %184 = vmatprep.subr.mxu0 0.0
    %185 = vmatpush1.msra.mxu0 %v77
    %186 = vmatprep.subr.mxu0 0.0
    %187 = vmatpush1.msra.mxu0 %v78
    %188 = vmatprep.subr.mxu0 0.0
    %189 = vmatpush1.msra.mxu0 %v79
    %190 = vmatprep.subr.mxu0 0.0
    %191 = vmatpush1.msra.mxu0 %v80
    %192 = vmatprep.subr.mxu0 0.0
    %193 = vmatpush1.msra.mxu0 0.0
    %194 = vmatprep.subr.mxu0 0.0
    %195 = vmatpush1.msra.mxu0 0.0
    %196 = vmatprep.subr.mxu0 0.0
    %197 = vmatpush1.msra.mxu0 0.0
    %198 = vmatprep.subr.mxu0 0.0
    %199 = vmatpush1.msra.mxu0 0.0
    %200 = vmatprep.subr.mxu0 0.0
    %201 = vmatpush1.msra.mxu0 0.0
    %202 = vmatprep.subr.mxu0 0.0
    %203 = vmatpush1.msra.mxu0 0.0
    %204 = vmatprep.subr.mxu0 0.0
    %205 = vmatpush1.msra.mxu0 0.0
    %206 = vmatprep.subr.mxu0 0.0
    %207 = vmatpush1.msra.mxu0 0.0
    %208 = vmatprep.subr.mxu0 0.0
    %209 = vmatpush1.msra.mxu0 0.0
    %210 = vmatprep.subr.mxu0 0.0
    %211 = vmatpush1.msra.mxu0 0.0
    %212 = vmatprep.subr.mxu0 0.0
    %213 = vmatpush1.msra.mxu0 0.0
    %214 = vmatprep.subr.mxu0 0.0
    %215 = vmatpush1.msra.mxu0 0.0
    %216 = vmatprep.subr.mxu0 0.0
    %217 = vmatpush1.msra.mxu0 0.0
    %218 = vmatprep.subr.mxu0 0.0
    %219 = vmatpush1.msra.mxu0 0.0
    %220 = vmatprep.subr.mxu0 0.0
    %221 = vmatpush1.msra.mxu0 0.0
    %222 = vmatprep.subr.mxu0 0.0
    %223 = vmatpush1.msra.mxu0 0.0
    %224 = vmatprep.subr.mxu0 0.0
    %225 = vmatpush1.msra.mxu0 0.0
    %226 = vmatprep.subr.mxu0 0.0
    %227 = vmatpush1.msra.mxu0 0.0
    %228 = vmatprep.subr.mxu0 0.0
    %229 = vmatpush1.msra.mxu0 0.0
    %230 = vmatprep.subr.mxu0 0.0
    %231 = vmatpush1.msra.mxu0 0.0
    %232 = vmatprep.subr.mxu0 0.0
    %233 = vmatpush1.msra.mxu0 0.0
    %234 = vmatprep.subr.mxu0 0.0
    %235 = vmatpush1.msra.mxu0 0.0
    %236 = vmatprep.subr.mxu0 0.0
    %237 = vmatpush1.msra.mxu0 0.0
    %238 = vmatprep.subr.mxu0 0.0
    %239 = vmatpush1.msra.mxu0 0.0
    %240 = vmatprep.subr.mxu0 0.0
    %241 = vmatpush1.msra.mxu0 0.0
    %242 = vmatprep.subr.mxu0 0.0
    %243 = vmatpush1.msra.mxu0 0.0
    %244 = vmatprep.subr.mxu0 0.0
    %245 = vmatpush1.msra.mxu0 0.0
    %246 = vmatprep.subr.mxu0 0.0
    %247 = vmatpush1.msra.mxu0 0.0
    %248 = vmatprep.mubr.f32.mxu0 0.0
    %249 = vmatmul.mubr.f32.gmra.mrb[0].mxu0 %v91
    %v250 = vpop.f32.mrb[0].mxu0
    %v251 = vadd.f32 %v86, %v250
    %v252 = vpop.f32.mrb[0].mxu0
    %253 = vdwg.mxu0
    %255 = vrot.lane.b32.xlu0 %v183, 32
    %v256 = vpop.permute.xlu0 %255
    %v257 = vsel %vm89, %v256, 0
    %259 = vmatprep.subr.mxu0 0.0
    %260 = vmatpush1.msra.mxu0 %v73
    %261 = vmatprep.subr.mxu0 0.0
    %262 = vmatpush1.msra.mxu0 %v74
    %263 = vmatprep.subr.mxu0 0.0
    %264 = vmatpush1.msra.mxu0 %v75
    %265 = vmatprep.subr.mxu0 0.0
    %266 = vmatpush1.msra.mxu0 %v76
    %267 = vmatprep.subr.mxu0 0.0
    %268 = vmatpush1.msra.mxu0 0.0
    %269 = vmatprep.subr.mxu0 0.0
    %270 = vmatpush1.msra.mxu0 0.0
    %271 = vmatprep.subr.mxu0 0.0
    %272 = vmatpush1.msra.mxu0 0.0
    %273 = vmatprep.subr.mxu0 0.0
    %274 = vmatpush1.msra.mxu0 0.0
    %275 = vmatprep.subr.mxu0 0.0
    %276 = vmatpush1.msra.mxu0 0.0
    %277 = vmatprep.subr.mxu0 0.0
    %278 = vmatpush1.msra.mxu0 0.0
    %279 = vmatprep.subr.mxu0 0.0
    %280 = vmatpush1.msra.mxu0 0.0
    %281 = vmatprep.subr.mxu0 0.0
    %282 = vmatpush1.msra.mxu0 0.0
    %283 = vmatprep.subr.mxu0 0.0
    %284 = vmatpush1.msra.mxu0 0.0
    %285 = vmatprep.subr.mxu0 0.0
    %286 = vmatpush1.msra.mxu0 0.0
    %287 = vmatprep.subr.mxu0 0.0
    %288 = vmatpush1.msra.mxu0 0.0
    %289 = vmatprep.subr.mxu0 0.0
    %290 = vmatpush1.msra.mxu0 0.0
    %291 = vmatprep.subr.mxu0 0.0
    %292 = vmatpush1.msra.mxu0 0.0
    %293 = vmatprep.subr.mxu0 0.0
    %294 = vmatpush1.msra.mxu0 0.0
    %295 = vmatprep.subr.mxu0 0.0
    %296 = vmatpush1.msra.mxu0 0.0
    %297 = vmatprep.subr.mxu0 0.0
    %298 = vmatpush1.msra.mxu0 0.0
    %299 = vmatprep.subr.mxu0 0.0
    %300 = vmatpush1.msra.mxu0 0.0
    %301 = vmatprep.subr.mxu0 0.0
    %302 = vmatpush1.msra.mxu0 0.0
    %303 = vmatprep.subr.mxu0 0.0
    %304 = vmatpush1.msra.mxu0 0.0
    %305 = vmatprep.subr.mxu0 0.0
    %306 = vmatpush1.msra.mxu0 0.0
    %307 = vmatprep.subr.mxu0 0.0
    %308 = vmatpush1.msra.mxu0 0.0
    %309 = vmatprep.subr.mxu0 0.0
    %310 = vmatpush1.msra.mxu0 0.0
    %311 = vmatprep.subr.mxu0 0.0
    %312 = vmatpush1.msra.mxu0 0.0
    %313 = vmatprep.subr.mxu0 0.0
    %314 = vmatpush1.msra.mxu0 0.0
    %315 = vmatprep.subr.mxu0 0.0
    %316 = vmatpush1.msra.mxu0 0.0
    %317 = vmatprep.subr.mxu0 0.0
    %318 = vmatpush1.msra.mxu0 0.0
    %319 = vmatprep.subr.mxu0 0.0
    %320 = vmatpush1.msra.mxu0 0.0
    %321 = vmatprep.subr.mxu0 0.0
    %322 = vmatpush1.msra.mxu0 0.0
    %323 = vmatprep.mubr.f32.mxu0 0.0
    %324 = vmatmul.mubr.f32.gmra.mrb[0].mxu0 %v257
    %v325 = vpop.f32.mrb[0].mxu0
    %v326 = vadd.f32 0.0, %v325
    %v327 = vpop.f32.mrb[0].mxu0
    %328 = vdwg.mxu0
    %v329 = vadd.f32 %v251, %v326
    %v330 = vtanh.pop %v329
    %v331 = vmul.f32 %v330, 0.5
    %v332 = vadd.f32 %v331, 0.5
    %v333 = vmul.f32 %v332, 0.0
    %335 = vrot.lane.b32.xlu0 %v330, 64
    %v336 = vpop.permute.xlu0 %335
    %v338 = vmul.f32 %v332, %v336
    %340 = vrot.lane.b32.xlu0 %v338, 32
    %v341 = vpop.permute.xlu0 %340
    %v343 = vadd.f32 %v333, %v341
    %v344 = vtanh.pop %v343
    %346 = vrot.lane.b32.xlu0 %v344, 64
    %v347 = vpop.permute.xlu0 %346
    %v349 = vmul.f32 %v332, %v347
    %s350 = scalar_lea.vmem [#allocation3], 8
    %v351 = vld [vmem:[%s350] sm:$0xff]
    %352 = vmatprep.subr.mxu0 0.0
    %353 = vmatpush1.msra.mxu0 %v69
    %354 = vmatprep.subr.mxu0 0.0
    %355 = vmatpush1.msra.mxu0 %v70
    %356 = vmatprep.subr.mxu0 0.0
    %357 = vmatpush1.msra.mxu0 %v71
    %358 = vmatprep.subr.mxu0 0.0
    %359 = vmatpush1.msra.mxu0 %v72
    %360 = vmatprep.subr.mxu0 0.0
    %361 = vmatpush1.msra.mxu0 0.0
    %362 = vmatprep.subr.mxu0 0.0
    %363 = vmatpush1.msra.mxu0 0.0
    %364 = vmatprep.subr.mxu0 0.0
    %365 = vmatpush1.msra.mxu0 0.0
    %366 = vmatprep.subr.mxu0 0.0
    %367 = vmatpush1.msra.mxu0 0.0
    %368 = vmatprep.subr.mxu0 0.0
    %369 = vmatpush1.msra.mxu0 0.0
    %370 = vmatprep.subr.mxu0 0.0
    %371 = vmatpush1.msra.mxu0 0.0
    %372 = vmatprep.subr.mxu0 0.0
    %373 = vmatpush1.msra.mxu0 0.0
    %374 = vmatprep.subr.mxu0 0.0
    %375 = vmatpush1.msra.mxu0 0.0
    %376 = vmatprep.subr.mxu0 0.0
    %377 = vmatpush1.msra.mxu0 0.0
    %378 = vmatprep.subr.mxu0 0.0
    %379 = vmatpush1.msra.mxu0 0.0
    %380 = vmatprep.subr.mxu0 0.0
    %381 = vmatpush1.msra.mxu0 0.0
    %382 = vmatprep.subr.mxu0 0.0
    %383 = vmatpush1.msra.mxu0 0.0
    %384 = vmatprep.subr.mxu0 0.0
    %385 = vmatpush1.msra.mxu0 0.0
    %386 = vmatprep.subr.mxu0 0.0
    %387 = vmatpush1.msra.mxu0 0.0
    %388 = vmatprep.subr.mxu0 0.0
    %389 = vmatpush1.msra.mxu0 0.0
    %390 = vmatprep.subr.mxu0 0.0
    %391 = vmatpush1.msra.mxu0 0.0
    %392 = vmatprep.subr.mxu0 0.0
    %393 = vmatpush1.msra.mxu0 0.0
    %394 = vmatprep.subr.mxu0 0.0
    %395 = vmatpush1.msra.mxu0 0.0
    %396 = vmatprep.subr.mxu0 0.0
    %397 = vmatpush1.msra.mxu0 0.0
    %398 = vmatprep.subr.mxu0 0.0
    %399 = vmatpush1.msra.mxu0 0.0
    %400 = vmatprep.subr.mxu0 0.0
    %401 = vmatpush1.msra.mxu0 0.0
    %402 = vmatprep.subr.mxu0 0.0
    %403 = vmatpush1.msra.mxu0 0.0
    %404 = vmatprep.subr.mxu0 0.0
    %405 = vmatpush1.msra.mxu0 0.0
    %406 = vmatprep.subr.mxu0 0.0
    %407 = vmatpush1.msra.mxu0 0.0
    %408 = vmatprep.subr.mxu0 0.0
    %409 = vmatpush1.msra.mxu0 0.0
    %410 = vmatprep.subr.mxu0 0.0
    %411 = vmatpush1.msra.mxu0 0.0
    %412 = vmatprep.subr.mxu0 0.0
    %413 = vmatpush1.msra.mxu0 0.0
    %414 = vmatprep.subr.mxu0 0.0
    %415 = vmatpush1.msra.mxu0 0.0
    %416 = vmatprep.mubr.f32.mxu0 0.0
    %417 = vmatmul.mubr.f32.gmra.mrb[0].mxu0 %v257
    %v418 = vpop.f32.mrb[0].mxu0
    %v419 = vadd.f32 0.0, %v418
    %v420 = vpop.f32.mrb[0].mxu0
    %421 = vdwg.mxu0
    %v422 = vadd.f32 %v351, %v419
    %v423 = vtanh.pop %v422
    %v424 = vmul.f32 %v423, 0.5
    %v425 = vadd.f32 %v424, 0.5
    %v426 = vmul.f32 %v425, %v177
    %428 = vrot.lane.b32.xlu0 %v423, 64
    %v429 = vpop.permute.xlu0 %428
    %v431 = vmul.f32 %v425, %v429
    %433 = vrot.lane.b32.xlu0 %v431, 32
    %v434 = vpop.permute.xlu0 %433
    %v436 = vadd.f32 %v426, %v434
    %v437 = vtanh.pop %v436
    %439 = vrot.lane.b32.xlu0 %v437, 64
    %v440 = vpop.permute.xlu0 %439
    %v442 = vmul.f32 %v425, %v440
    %444 = vrot.lane.b32.xlu0 %v349, 32
    %v445 = vpop.permute.xlu0 %444
    %v446 = vsel %vm89, %v445, 0
    %448 = vmatprep.subr.mxu0 0.0
    %449 = vmatpush1.msra.mxu0 %v77
    %450 = vmatprep.subr.mxu0 0.0
    %451 = vmatpush1.msra.mxu0 %v78
    %452 = vmatprep.subr.mxu0 0.0
    %453 = vmatpush1.msra.mxu0 %v79
    %454 = vmatprep.subr.mxu0 0.0
    %455 = vmatpush1.msra.mxu0 %v80
    %456 = vmatprep.subr.mxu0 0.0
    %457 = vmatpush1.msra.mxu0 0.0
    %458 = vmatprep.subr.mxu0 0.0
    %459 = vmatpush1.msra.mxu0 0.0
    %460 = vmatprep.subr.mxu0 0.0
    %461 = vmatpush1.msra.mxu0 0.0
    %462 = vmatprep.subr.mxu0 0.0
    %463 = vmatpush1.msra.mxu0 0.0
    %464 = vmatprep.subr.mxu0 0.0
    %465 = vmatpush1.msra.mxu0 0.0
    %466 = vmatprep.subr.mxu0 0.0
    %467 = vmatpush1.msra.mxu0 0.0
    %468 = vmatprep.subr.mxu0 0.0
    %469 = vmatpush1.msra.mxu0 0.0
    %470 = vmatprep.subr.mxu0 0.0
    %471 = vmatpush1.msra.mxu0 0.0
    %472 = vmatprep.subr.mxu0 0.0
    %473 = vmatpush1.msra.mxu0 0.0
    %474 = vmatprep.subr.mxu0 0.0
    %475 = vmatpush1.msra.mxu0 0.0
    %476 = vmatprep.subr.mxu0 0.0
    %477 = vmatpush1.msra.mxu0 0.0
    %478 = vmatprep.subr.mxu0 0.0
    %479 = vmatpush1.msra.mxu0 0.0
    %480 = vmatprep.subr.mxu0 0.0
    %481 = vmatpush1.msra.mxu0 0.0
    %482 = vmatprep.subr.mxu0 0.0
    %483 = vmatpush1.msra.mxu0 0.0
    %484 = vmatprep.subr.mxu0 0.0
    %485 = vmatpush1.msra.mxu0 0.0
    %486 = vmatprep.subr.mxu0 0.0
    %487 = vmatpush1.msra.mxu0 0.0
    %488 = vmatprep.subr.mxu0 0.0
    %489 = vmatpush1.msra.mxu0 0.0
    %490 = vmatprep.subr.mxu0 0.0
    %491 = vmatpush1.msra.mxu0 0.0
    %492 = vmatprep.subr.mxu0 0.0
    %493 = vmatpush1.msra.mxu0 0.0
    %494 = vmatprep.subr.mxu0 0.0
    %495 = vmatpush1.msra.mxu0 0.0
    %496 = vmatprep.subr.mxu0 0.0
    %497 = vmatpush1.msra.mxu0 0.0
    %498 = vmatprep.subr.mxu0 0.0
    %499 = vmatpush1.msra.mxu0 0.0
    %500 = vmatprep.subr.mxu0 0.0
    %501 = vmatpush1.msra.mxu0 0.0
    %502 = vmatprep.subr.mxu0 0.0
    %503 = vmatpush1.msra.mxu0 0.0
    %504 = vmatprep.subr.mxu0 0.0
    %505 = vmatpush1.msra.mxu0 0.0
    %506 = vmatprep.subr.mxu0 0.0
    %507 = vmatpush1.msra.mxu0 0.0
    %508 = vmatprep.subr.mxu0 0.0
    %509 = vmatpush1.msra.mxu0 0.0
    %510 = vmatprep.subr.mxu0 0.0
    %511 = vmatpush1.msra.mxu0 0.0
    %512 = vmatprep.mubr.f32.mxu0 0.0
    %513 = vmatmul.mubr.f32.gmra.mrb[0].mxu0 %v446
    %v514 = vpop.f32.mrb[0].mxu0
    %v515 = vadd.f32 %v86, %v514
    %v516 = vpop.f32.mrb[0].mxu0
    %517 = vdwg.mxu0
    %519 = vrot.lane.b32.xlu0 %v442, 32
    %v520 = vpop.permute.xlu0 %519
    %v521 = vsel %vm89, %v520, 0
    %523 = vmatprep.subr.mxu0 0.0
    %524 = vmatpush1.msra.mxu0 %v73
    %525 = vmatprep.subr.mxu0 0.0
    %526 = vmatpush1.msra.mxu0 %v74
    %527 = vmatprep.subr.mxu0 0.0
    %528 = vmatpush1.msra.mxu0 %v75
    %529 = vmatprep.subr.mxu0 0.0
    %530 = vmatpush1.msra.mxu0 %v76
    %531 = vmatprep.subr.mxu0 0.0
    %532 = vmatpush1.msra.mxu0 0.0
    %533 = vmatprep.subr.mxu0 0.0
    %534 = vmatpush1.msra.mxu0 0.0
    %535 = vmatprep.subr.mxu0 0.0
    %536 = vmatpush1.msra.mxu0 0.0
    %537 = vmatprep.subr.mxu0 0.0
    %538 = vmatpush1.msra.mxu0 0.0
    %539 = vmatprep.subr.mxu0 0.0
    %540 = vmatpush1.msra.mxu0 0.0
    %541 = vmatprep.subr.mxu0 0.0
    %542 = vmatpush1.msra.mxu0 0.0
    %543 = vmatprep.subr.mxu0 0.0
    %544 = vmatpush1.msra.mxu0 0.0
    %545 = vmatprep.subr.mxu0 0.0
    %546 = vmatpush1.msra.mxu0 0.0
    %547 = vmatprep.subr.mxu0 0.0
    %548 = vmatpush1.msra.mxu0 0.0
    %549 = vmatprep.subr.mxu0 0.0
    %550 = vmatpush1.msra.mxu0 0.0
    %551 = vmatprep.subr.mxu0 0.0
    %552 = vmatpush1.msra.mxu0 0.0
    %553 = vmatprep.subr.mxu0 0.0
    %554 = vmatpush1.msra.mxu0 0.0
    %555 = vmatprep.subr.mxu0 0.0
    %556 = vmatpush1.msra.mxu0 0.0
    %557 = vmatprep.subr.mxu0 0.0
    %558 = vmatpush1.msra.mxu0 0.0
    %559 = vmatprep.subr.mxu0 0.0
    %560 = vmatpush1.msra.mxu0 0.0
    %561 = vmatprep.subr.mxu0 0.0
    %562 = vmatpush1.msra.mxu0 0.0
    %563 = vmatprep.subr.mxu0 0.0
    %564 = vmatpush1.msra.mxu0 0.0
    %565 = vmatprep.subr.mxu0 0.0
    %566 = vmatpush1.msra.mxu0 0.0
    %567 = vmatprep.subr.mxu0 0.0
    %568 = vmatpush1.msra.mxu0 0.0
    %569 = vmatprep.subr.mxu0 0.0
    %570 = vmatpush1.msra.mxu0 0.0
    %571 = vmatprep.subr.mxu0 0.0
    %572 = vmatpush1.msra.mxu0 0.0
    %573 = vmatprep.subr.mxu0 0.0
    %574 = vmatpush1.msra.mxu0 0.0
    %575 = vmatprep.subr.mxu0 0.0
    %576 = vmatpush1.msra.mxu0 0.0
    %577 = vmatprep.subr.mxu0 0.0
    %578 = vmatpush1.msra.mxu0 0.0
    %579 = vmatprep.subr.mxu0 0.0
    %580 = vmatpush1.msra.mxu0 0.0
    %581 = vmatprep.subr.mxu0 0.0
    %582 = vmatpush1.msra.mxu0 0.0
    %583 = vmatprep.subr.mxu0 0.0
    %584 = vmatpush1.msra.mxu0 0.0
    %585 = vmatprep.subr.mxu0 0.0
    %586 = vmatpush1.msra.mxu0 0.0
    %587 = vmatprep.mubr.f32.mxu0 0.0
    %588 = vmatmul.mubr.f32.gmra.mrb[0].mxu0 %v521
    %v589 = vpop.f32.mrb[0].mxu0
    %v590 = vadd.f32 0.0, %v589
    %v591 = vpop.f32.mrb[0].mxu0
    %592 = vdwg.mxu0
    %v593 = vadd.f32 %v515, %v590
    %v594 = vtanh.pop %v593
    %v595 = vmul.f32 %v594, 0.5
    %v596 = vadd.f32 %v595, 0.5
    %v597 = vmul.f32 %v596, %v343
    %599 = vrot.lane.b32.xlu0 %v594, 64
    %v600 = vpop.permute.xlu0 %599
    %v602 = vmul.f32 %v596, %v600
    %604 = vrot.lane.b32.xlu0 %v602, 32
    %v605 = vpop.permute.xlu0 %604
    %v607 = vadd.f32 %v597, %v605
    %v608 = vtanh.pop %v607
    %610 = vrot.lane.b32.xlu0 %v608, 64
    %v611 = vpop.permute.xlu0 %610
    %v613 = vmul.f32 %v596, %v611
    %s614 = scalar_lea.vmem [#allocation3], 16
    %v615 = vld [vmem:[%s614] sm:$0xff]
    %616 = vmatprep.subr.mxu0 0.0
    %617 = vmatpush1.msra.mxu0 %v69
    %618 = vmatprep.subr.mxu0 0.0
    %619 = vmatpush1.msra.mxu0 %v70
    %620 = vmatprep.subr.mxu0 0.0
    %621 = vmatpush1.msra.mxu0 %v71
    %622 = vmatprep.subr.mxu0 0.0
    %623 = vmatpush1.msra.mxu0 %v72
    %624 = vmatprep.subr.mxu0 0.0
    %625 = vmatpush1.msra.mxu0 0.0
    %626 = vmatprep.subr.mxu0 0.0
    %627 = vmatpush1.msra.mxu0 0.0
    %628 = vmatprep.subr.mxu0 0.0
    %629 = vmatpush1.msra.mxu0 0.0
    %630 = vmatprep.subr.mxu0 0.0
    %631 = vmatpush1.msra.mxu0 0.0
    %632 = vmatprep.subr.mxu0 0.0
    %633 = vmatpush1.msra.mxu0 0.0
    %634 = vmatprep.subr.mxu0 0.0
    %635 = vmatpush1.msra.mxu0 0.0
    %636 = vmatprep.subr.mxu0 0.0
    %637 = vmatpush1.msra.mxu0 0.0
    %638 = vmatprep.subr.mxu0 0.0
    %639 = vmatpush1.msra.mxu0 0.0
    %640 = vmatprep.subr.mxu0 0.0
    %641 = vmatpush1.msra.mxu0 0.0
    %642 = vmatprep.subr.mxu0 0.0
    %643 = vmatpush1.msra.mxu0 0.0
    %644 = vmatprep.subr.mxu0 0.0
    %645 = vmatpush1.msra.mxu0 0.0
    %646 = vmatprep.subr.mxu0 0.0
    %647 = vmatpush1.msra.mxu0 0.0
    %648 = vmatprep.subr.mxu0 0.0
    %649 = vmatpush1.msra.mxu0 0.0
    %650 = vmatprep.subr.mxu0 0.0
    %651 = vmatpush1.msra.mxu0 0.0
    %652 = vmatprep.subr.mxu0 0.0
    %653 = vmatpush1.msra.mxu0 0.0
    %654 = vmatprep.subr.mxu0 0.0
    %655 = vmatpush1.msra.mxu0 0.0
    %656 = vmatprep.subr.mxu0 0.0
    %657 = vmatpush1.msra.mxu0 0.0
    %658 = vmatprep.subr.mxu0 0.0
    %659 = vmatpush1.msra.mxu0 0.0
    %660 = vmatprep.subr.mxu0 0.0
    %661 = vmatpush1.msra.mxu0 0.0
    %662 = vmatprep.subr.mxu0 0.0
    %663 = vmatpush1.msra.mxu0 0.0
    %664 = vmatprep.subr.mxu0 0.0
    %665 = vmatpush1.msra.mxu0 0.0
    %666 = vmatprep.subr.mxu0 0.0
    %667 = vmatpush1.msra.mxu0 0.0
    %668 = vmatprep.subr.mxu0 0.0
    %669 = vmatpush1.msra.mxu0 0.0
    %670 = vmatprep.subr.mxu0 0.0
    %671 = vmatpush1.msra.mxu0 0.0
    %672 = vmatprep.subr.mxu0 0.0
    %673 = vmatpush1.msra.mxu0 0.0
    %674 = vmatprep.subr.mxu0 0.0
    %675 = vmatpush1.msra.mxu0 0.0
    %676 = vmatprep.subr.mxu0 0.0
    %677 = vmatpush1.msra.mxu0 0.0
    %678 = vmatprep.subr.mxu0 0.0
    %679 = vmatpush1.msra.mxu0 0.0
    %680 = vmatprep.mubr.f32.mxu0 0.0
    %681 = vmatmul.mubr.f32.gmra.mrb[0].mxu0 %v521
    %v682 = vpop.f32.mrb[0].mxu0
    %v683 = vadd.f32 0.0, %v682
    %v684 = vpop.f32.mrb[0].mxu0
    %685 = vdwg.mxu0
    %v686 = vadd.f32 %v615, %v683
    %v687 = vtanh.pop %v686
    %v688 = vmul.f32 %v687, 0.5
    %v689 = vadd.f32 %v688, 0.5
    %v690 = vmul.f32 %v689, %v436
    %692 = vrot.lane.b32.xlu0 %v687, 64
    %v693 = vpop.permute.xlu0 %692
    %v695 = vmul.f32 %v689, %v693
    %697 = vrot.lane.b32.xlu0 %v695, 32
    %v698 = vpop.permute.xlu0 %697
    %v700 = vadd.f32 %v690, %v698
    %v701 = vtanh.pop %v700
    %703 = vrot.lane.b32.xlu0 %v701, 64
    %v704 = vpop.permute.xlu0 %703
    %v706 = vmul.f32 %v689, %v704
    %708 = vrot.lane.b32.xlu0 %v613, 32
    %v709 = vpop.permute.xlu0 %708
    %v710 = vsel %vm89, %v709, 0
    %712 = vmatprep.subr.mxu0 0.0
    %713 = vmatpush1.msra.mxu0 %v77
    %714 = vmatprep.subr.mxu0 0.0
    %715 = vmatpush1.msra.mxu0 %v78
    %716 = vmatprep.subr.mxu0 0.0
    %717 = vmatpush1.msra.mxu0 %v79
    %718 = vmatprep.subr.mxu0 0.0
    %719 = vmatpush1.msra.mxu0 %v80
    %720 = vmatprep.subr.mxu0 0.0
    %721 = vmatpush1.msra.mxu0 0.0
    %722 = vmatprep.subr.mxu0 0.0
    %723 = vmatpush1.msra.mxu0 0.0
    %724 = vmatprep.subr.mxu0 0.0
    %725 = vmatpush1.msra.mxu0 0.0
    %726 = vmatprep.subr.mxu0 0.0
    %727 = vmatpush1.msra.mxu0 0.0
    %728 = vmatprep.subr.mxu0 0.0
    %729 = vmatpush1.msra.mxu0 0.0
    %730 = vmatprep.subr.mxu0 0.0
    %731 = vmatpush1.msra.mxu0 0.0
    %732 = vmatprep.subr.mxu0 0.0
    %733 = vmatpush1.msra.mxu0 0.0
    %734 = vmatprep.subr.mxu0 0.0
    %735 = vmatpush1.msra.mxu0 0.0
    %736 = vmatprep.subr.mxu0 0.0
    %737 = vmatpush1.msra.mxu0 0.0
    %738 = vmatprep.subr.mxu0 0.0
    %739 = vmatpush1.msra.mxu0 0.0
    %740 = vmatprep.subr.mxu0 0.0
    %741 = vmatpush1.msra.mxu0 0.0
    %742 = vmatprep.subr.mxu0 0.0
    %743 = vmatpush1.msra.mxu0 0.0
    %744 = vmatprep.subr.mxu0 0.0
    %745 = vmatpush1.msra.mxu0 0.0
    %746 = vmatprep.subr.mxu0 0.0
    %747 = vmatpush1.msra.mxu0 0.0
    %748 = vmatprep.subr.mxu0 0.0
    %749 = vmatpush1.msra.mxu0 0.0
    %750 = vmatprep.subr.mxu0 0.0
    %751 = vmatpush1.msra.mxu0 0.0
    %752 = vmatprep.subr.mxu0 0.0
    %753 = vmatpush1.msra.mxu0 0.0
    %754 = vmatprep.subr.mxu0 0.0
    %755 = vmatpush1.msra.mxu0 0.0
    %756 = vmatprep.subr.mxu0 0.0
    %757 = vmatpush1.msra.mxu0 0.0
    %758 = vmatprep.subr.mxu0 0.0
    %759 = vmatpush1.msra.mxu0 0.0
    %760 = vmatprep.subr.mxu0 0.0
    %761 = vmatpush1.msra.mxu0 0.0
    %762 = vmatprep.subr.mxu0 0.0
    %763 = vmatpush1.msra.mxu0 0.0
    %764 = vmatprep.subr.mxu0 0.0
    %765 = vmatpush1.msra.mxu0 0.0
    %766 = vmatprep.subr.mxu0 0.0
    %767 = vmatpush1.msra.mxu0 0.0
    %768 = vmatprep.subr.mxu0 0.0
    %769 = vmatpush1.msra.mxu0 0.0
    %770 = vmatprep.subr.mxu0 0.0
    %771 = vmatpush1.msra.mxu0 0.0
    %772 = vmatprep.subr.mxu0 0.0
    %773 = vmatpush1.msra.mxu0 0.0
    %774 = vmatprep.subr.mxu0 0.0
    %775 = vmatpush1.msra.mxu0 0.0
    %776 = vmatprep.mubr.f32.mxu0 0.0
    %777 = vmatmul.mubr.f32.gmra.mrb[0].mxu0 %v710
    %v778 = vpop.f32.mrb[0].mxu0
    %v779 = vadd.f32 %v86, %v778
    %v780 = vpop.f32.mrb[0].mxu0
    %781 = vdwg.mxu0
    %783 = vrot.lane.b32.xlu0 %v706, 32
    %v784 = vpop.permute.xlu0 %783
    %v785 = vsel %vm89, %v784, 0
    %787 = vmatprep.subr.mxu0 0.0
    %788 = vmatpush1.msra.mxu0 %v73
    %789 = vmatprep.subr.mxu0 0.0
    %790 = vmatpush1.msra.mxu0 %v74
    %791 = vmatprep.subr.mxu0 0.0
    %792 = vmatpush1.msra.mxu0 %v75
    %793 = vmatprep.subr.mxu0 0.0
    %794 = vmatpush1.msra.mxu0 %v76
    %795 = vmatprep.subr.mxu0 0.0
    %796 = vmatpush1.msra.mxu0 0.0
    %797 = vmatprep.subr.mxu0 0.0
    %798 = vmatpush1.msra.mxu0 0.0
    %799 = vmatprep.subr.mxu0 0.0
    %800 = vmatpush1.msra.mxu0 0.0
    %801 = vmatprep.subr.mxu0 0.0
    %802 = vmatpush1.msra.mxu0 0.0
    %803 = vmatprep.subr.mxu0 0.0
    %804 = vmatpush1.msra.mxu0 0.0
    %805 = vmatprep.subr.mxu0 0.0
    %806 = vmatpush1.msra.mxu0 0.0
    %807 = vmatprep.subr.mxu0 0.0
    %808 = vmatpush1.msra.mxu0 0.0
    %809 = vmatprep.subr.mxu0 0.0
    %810 = vmatpush1.msra.mxu0 0.0
    %811 = vmatprep.subr.mxu0 0.0
    %812 = vmatpush1.msra.mxu0 0.0
    %813 = vmatprep.subr.mxu0 0.0
    %814 = vmatpush1.msra.mxu0 0.0
    %815 = vmatprep.subr.mxu0 0.0
    %816 = vmatpush1.msra.mxu0 0.0
    %817 = vmatprep.subr.mxu0 0.0
    %818 = vmatpush1.msra.mxu0 0.0
    %819 = vmatprep.subr.mxu0 0.0
    %820 = vmatpush1.msra.mxu0 0.0
    %821 = vmatprep.subr.mxu0 0.0
    %822 = vmatpush1.msra.mxu0 0.0
    %823 = vmatprep.subr.mxu0 0.0
    %824 = vmatpush1.msra.mxu0 0.0
    %825 = vmatprep.subr.mxu0 0.0
    %826 = vmatpush1.msra.mxu0 0.0
    %827 = vmatprep.subr.mxu0 0.0
    %828 = vmatpush1.msra.mxu0 0.0
    %829 = vmatprep.subr.mxu0 0.0
    %830 = vmatpush1.msra.mxu0 0.0
    %831 = vmatprep.subr.mxu0 0.0
    %832 = vmatpush1.msra.mxu0 0.0
    %833 = vmatprep.subr.mxu0 0.0
    %834 = vmatpush1.msra.mxu0 0.0
    %835 = vmatprep.subr.mxu0 0.0
    %836 = vmatpush1.msra.mxu0 0.0
    %837 = vmatprep.subr.mxu0 0.0
    %838 = vmatpush1.msra.mxu0 0.0
    %839 = vmatprep.subr.mxu0 0.0
    %840 = vmatpush1.msra.mxu0 0.0
    %841 = vmatprep.subr.mxu0 0.0
    %842 = vmatpush1.msra.mxu0 0.0
    %843 = vmatprep.subr.mxu0 0.0
    %844 = vmatpush1.msra.mxu0 0.0
    %845 = vmatprep.subr.mxu0 0.0
    %846 = vmatpush1.msra.mxu0 0.0
    %847 = vmatprep.subr.mxu0 0.0
    %848 = vmatpush1.msra.mxu0 0.0
    %849 = vmatprep.subr.mxu0 0.0
    %850 = vmatpush1.msra.mxu0 0.0
    %851 = vmatprep.mubr.f32.mxu0 0.0
    %852 = vmatmul.mubr.f32.gmra.mrb[0].mxu0 %v785
    %v853 = vpop.f32.mrb[0].mxu0
    %v854 = vadd.f32 0.0, %v853
    %v855 = vpop.f32.mrb[0].mxu0
    %856 = vdwg.mxu0
    %v857 = vadd.f32 %v779, %v854
    %v858 = vtanh.pop %v857
    %v859 = vmul.f32 %v858, 0.5
    %v860 = vadd.f32 %v859, 0.5
    %v861 = vmul.f32 %v860, %v607
    %863 = vrot.lane.b32.xlu0 %v858, 64
    %v864 = vpop.permute.xlu0 %863
    %v866 = vmul.f32 %v860, %v864
    %868 = vrot.lane.b32.xlu0 %v866, 32
    %v869 = vpop.permute.xlu0 %868
    %v871 = vadd.f32 %v861, %v869
    %v872 = vtanh.pop %v871
    %874 = vrot.lane.b32.xlu0 %v872, 64
    %v875 = vpop.permute.xlu0 %874
    %v877 = vmul.f32 %v860, %v875
    %s878 = scalar_lea.vmem [#allocation3], 24
    %v879 = vld [vmem:[%s878] sm:$0xff]
    %880 = vmatprep.subr.mxu0 0.0
    %881 = vmatpush1.msra.mxu0 %v69
    %882 = vmatprep.subr.mxu0 0.0
    %883 = vmatpush1.msra.mxu0 %v70
    %884 = vmatprep.subr.mxu0 0.0
    %885 = vmatpush1.msra.mxu0 %v71
    %886 = vmatprep.subr.mxu0 0.0
    %887 = vmatpush1.msra.mxu0 %v72
    %888 = vmatprep.subr.mxu0 0.0
    %889 = vmatpush1.msra.mxu0 0.0
    %890 = vmatprep.subr.mxu0 0.0
    %891 = vmatpush1.msra.mxu0 0.0
    %892 = vmatprep.subr.mxu0 0.0
    %893 = vmatpush1.msra.mxu0 0.0
    %894 = vmatprep.subr.mxu0 0.0
    %895 = vmatpush1.msra.mxu0 0.0
    %896 = vmatprep.subr.mxu0 0.0
    %897 = vmatpush1.msra.mxu0 0.0
    %898 = vmatprep.subr.mxu0 0.0
    %899 = vmatpush1.msra.mxu0 0.0
    %900 = vmatprep.subr.mxu0 0.0
    %901 = vmatpush1.msra.mxu0 0.0
    %902 = vmatprep.subr.mxu0 0.0
    %903 = vmatpush1.msra.mxu0 0.0
    %904 = vmatprep.subr.mxu0 0.0
    %905 = vmatpush1.msra.mxu0 0.0
    %906 = vmatprep.subr.mxu0 0.0
    %907 = vmatpush1.msra.mxu0 0.0
    %908 = vmatprep.subr.mxu0 0.0
    %909 = vmatpush1.msra.mxu0 0.0
    %910 = vmatprep.subr.mxu0 0.0
    %911 = vmatpush1.msra.mxu0 0.0
    %912 = vmatprep.subr.mxu0 0.0
    %913 = vmatpush1.msra.mxu0 0.0
    %914 = vmatprep.subr.mxu0 0.0
    %915 = vmatpush1.msra.mxu0 0.0
    %916 = vmatprep.subr.mxu0 0.0
    %917 = vmatpush1.msra.mxu0 0.0
    %918 = vmatprep.subr.mxu0 0.0
    %919 = vmatpush1.msra.mxu0 0.0
    %920 = vmatprep.subr.mxu0 0.0
    %921 = vmatpush1.msra.mxu0 0.0
    %922 = vmatprep.subr.mxu0 0.0
    %923 = vmatpush1.msra.mxu0 0.0
    %924 = vmatprep.subr.mxu0 0.0
    %925 = vmatpush1.msra.mxu0 0.0
    %926 = vmatprep.subr.mxu0 0.0
    %927 = vmatpush1.msra.mxu0 0.0
    %928 = vmatprep.subr.mxu0 0.0
    %929 = vmatpush1.msra.mxu0 0.0
    %930 = vmatprep.subr.mxu0 0.0
    %931 = vmatpush1.msra.mxu0 0.0
    %932 = vmatprep.subr.mxu0 0.0
    %933 = vmatpush1.msra.mxu0 0.0
    %934 = vmatprep.subr.mxu0 0.0
    %935 = vmatpush1.msra.mxu0 0.0
    %936 = vmatprep.subr.mxu0 0.0
    %937 = vmatpush1.msra.mxu0 0.0
    %938 = vmatprep.subr.mxu0 0.0
    %939 = vmatpush1.msra.mxu0 0.0
    %940 = vmatprep.subr.mxu0 0.0
    %941 = vmatpush1.msra.mxu0 0.0
    %942 = vmatprep.subr.mxu0 0.0
    %943 = vmatpush1.msra.mxu0 0.0
    %944 = vmatprep.mubr.f32.mxu0 0.0
    %945 = vmatmul.mubr.f32.gmra.mrb[0].mxu0 %v785
    %v946 = vpop.f32.mrb[0].mxu0
    %v947 = vadd.f32 0.0, %v946
    %v948 = vpop.f32.mrb[0].mxu0
    %949 = vdwg.mxu0
    %v950 = vadd.f32 %v879, %v947
    %v951 = vtanh.pop %v950
    %v952 = vmul.f32 %v951, 0.5
    %v953 = vadd.f32 %v952, 0.5
    %v954 = vmul.f32 %v953, %v700
    %956 = vrot.lane.b32.xlu0 %v951, 64
    %v957 = vpop.permute.xlu0 %956
    %v959 = vmul.f32 %v953, %v957
    %961 = vrot.lane.b32.xlu0 %v959, 32
    %v962 = vpop.permute.xlu0 %961
    %v964 = vadd.f32 %v954, %v962
    %v965 = vtanh.pop %v964
    %967 = vrot.lane.b32.xlu0 %v965, 64
    %v968 = vpop.permute.xlu0 %967
    %v970 = vmul.f32 %v953, %v968
    %972 = vrot.lane.b32.xlu0 %v877, 32
    %v973 = vpop.permute.xlu0 %972
    %v974 = vsel %vm89, %v973, 0
    %976 = vmatprep.subr.mxu0 0.0
    %977 = vmatpush1.msra.mxu0 %v77
    %978 = vmatprep.subr.mxu0 0.0
    %979 = vmatpush1.msra.mxu0 %v78
    %980 = vmatprep.subr.mxu0 0.0
    %981 = vmatpush1.msra.mxu0 %v79
    %982 = vmatprep.subr.mxu0 0.0
    %983 = vmatpush1.msra.mxu0 %v80
    %984 = vmatprep.subr.mxu0 0.0
    %985 = vmatpush1.msra.mxu0 0.0
    %986 = vmatprep.subr.mxu0 0.0
    %987 = vmatpush1.msra.mxu0 0.0
    %988 = vmatprep.subr.mxu0 0.0
    %989 = vmatpush1.msra.mxu0 0.0
    %990 = vmatprep.subr.mxu0 0.0
    %991 = vmatpush1.msra.mxu0 0.0
    %992 = vmatprep.subr.mxu0 0.0
    %993 = vmatpush1.msra.mxu0 0.0
    %994 = vmatprep.subr.mxu0 0.0
    %995 = vmatpush1.msra.mxu0 0.0
    %996 = vmatprep.subr.mxu0 0.0
    %997 = vmatpush1.msra.mxu0 0.0
    %998 = vmatprep.subr.mxu0 0.0
    %999 = vmatpush1.msra.mxu0 0.0
    %1000 = vmatprep.subr.mxu0 0.0
    %1001 = vmatpush1.msra.mxu0 0.0
    %1002 = vmatprep.subr.mxu0 0.0
    %1003 = vmatpush1.msra.mxu0 0.0
    %1004 = vmatprep.subr.mxu0 0.0
    %1005 = vmatpush1.msra.mxu0 0.0
    %1006 = vmatprep.subr.mxu0 0.0
    %1007 = vmatpush1.msra.mxu0 0.0
    %1008 = vmatprep.subr.mxu0 0.0
    %1009 = vmatpush1.msra.mxu0 0.0
    %1010 = vmatprep.subr.mxu0 0.0
    %1011 = vmatpush1.msra.mxu0 0.0
    %1012 = vmatprep.subr.mxu0 0.0
    %1013 = vmatpush1.msra.mxu0 0.0
    %1014 = vmatprep.subr.mxu0 0.0
    %1015 = vmatpush1.msra.mxu0 0.0
    %1016 = vmatprep.subr.mxu0 0.0
    %1017 = vmatpush1.msra.mxu0 0.0
    %1018 = vmatprep.subr.mxu0 0.0
    %1019 = vmatpush1.msra.mxu0 0.0
    %1020 = vmatprep.subr.mxu0 0.0
    %1021 = vmatpush1.msra.mxu0 0.0
    %1022 = vmatprep.subr.mxu0 0.0
    %1023 = vmatpush1.msra.mxu0 0.0
    %1024 = vmatprep.subr.mxu0 0.0
    %1025 = vmatpush1.msra.mxu0 0.0
    %1026 = vmatprep.subr.mxu0 0.0
    %1027 = vmatpush1.msra.mxu0 0.0
    %1028 = vmatprep.subr.mxu0 0.0
    %1029 = vmatpush1.msra.mxu0 0.0
    %1030 = vmatprep.subr.mxu0 0.0
    %1031 = vmatpush1.msra.mxu0 0.0
    %1032 = vmatprep.subr.mxu0 0.0
    %1033 = vmatpush1.msra.mxu0 0.0
    %1034 = vmatprep.subr.mxu0 0.0
    %1035 = vmatpush1.msra.mxu0 0.0
    %1036 = vmatprep.subr.mxu0 0.0
    %1037 = vmatpush1.msra.mxu0 0.0
    %1038 = vmatprep.subr.mxu0 0.0
    %1039 = vmatpush1.msra.mxu0 0.0
    %1040 = vmatprep.mubr.f32.mxu0 0.0
    %1041 = vmatmul.mubr.f32.gmra.mrb[0].mxu0 %v974
    %v1042 = vpop.f32.mrb[0].mxu0
    %v1043 = vadd.f32 %v86, %v1042
    %v1044 = vpop.f32.mrb[0].mxu0
    %1045 = vdwg.mxu0
    %1047 = vrot.lane.b32.xlu0 %v970, 32
    %v1048 = vpop.permute.xlu0 %1047
    %v1049 = vsel %vm89, %v1048, 0
    %1051 = vmatprep.subr.mxu0 0.0
    %1052 = vmatpush1.msra.mxu0 %v73
    %1053 = vmatprep.subr.mxu0 0.0
    %1054 = vmatpush1.msra.mxu0 %v74
    %1055 = vmatprep.subr.mxu0 0.0
    %1056 = vmatpush1.msra.mxu0 %v75
    %1057 = vmatprep.subr.mxu0 0.0
    %1058 = vmatpush1.msra.mxu0 %v76
    %1059 = vmatprep.subr.mxu0 0.0
    %1060 = vmatpush1.msra.mxu0 0.0
    %1061 = vmatprep.subr.mxu0 0.0
    %1062 = vmatpush1.msra.mxu0 0.0
    %1063 = vmatprep.subr.mxu0 0.0
    %1064 = vmatpush1.msra.mxu0 0.0
    %1065 = vmatprep.subr.mxu0 0.0
    %1066 = vmatpush1.msra.mxu0 0.0
    %1067 = vmatprep.subr.mxu0 0.0
    %1068 = vmatpush1.msra.mxu0 0.0
    %1069 = vmatprep.subr.mxu0 0.0
    %1070 = vmatpush1.msra.mxu0 0.0
    %1071 = vmatprep.subr.mxu0 0.0
    %1072 = vmatpush1.msra.mxu0 0.0
    %1073 = vmatprep.subr.mxu0 0.0
    %1074 = vmatpush1.msra.mxu0 0.0
    %1075 = vmatprep.subr.mxu0 0.0
    %1076 = vmatpush1.msra.mxu0 0.0
    %1077 = vmatprep.subr.mxu0 0.0
    %1078 = vmatpush1.msra.mxu0 0.0
    %1079 = vmatprep.subr.mxu0 0.0
    %1080 = vmatpush1.msra.mxu0 0.0
    %1081 = vmatprep.subr.mxu0 0.0
    %1082 = vmatpush1.msra.mxu0 0.0
    %1083 = vmatprep.subr.mxu0 0.0
    %1084 = vmatpush1.msra.mxu0 0.0
    %1085 = vmatprep.subr.mxu0 0.0
    %1086 = vmatpush1.msra.mxu0 0.0
    %1087 = vmatprep.subr.mxu0 0.0
    %1088 = vmatpush1.msra.mxu0 0.0
    %1089 = vmatprep.subr.mxu0 0.0
    %1090 = vmatpush1.msra.mxu0 0.0
    %1091 = vmatprep.subr.mxu0 0.0
    %1092 = vmatpush1.msra.mxu0 0.0
    %1093 = vmatprep.subr.mxu0 0.0
    %1094 = vmatpush1.msra.mxu0 0.0
    %1095 = vmatprep.subr.mxu0 0.0
    %1096 = vmatpush1.msra.mxu0 0.0
    %1097 = vmatprep.subr.mxu0 0.0
    %1098 = vmatpush1.msra.mxu0 0.0
    %1099 = vmatprep.subr.mxu0 0.0
    %1100 = vmatpush1.msra.mxu0 0.0
    %1101 = vmatprep.subr.mxu0 0.0
    %1102 = vmatpush1.msra.mxu0 0.0
    %1103 = vmatprep.subr.mxu0 0.0
    %1104 = vmatpush1.msra.mxu0 0.0
    %1105 = vmatprep.subr.mxu0 0.0
    %1106 = vmatpush1.msra.mxu0 0.0
    %1107 = vmatprep.subr.mxu0 0.0
    %1108 = vmatpush1.msra.mxu0 0.0
    %1109 = vmatprep.subr.mxu0 0.0
    %1110 = vmatpush1.msra.mxu0 0.0
    %1111 = vmatprep.subr.mxu0 0.0
    %1112 = vmatpush1.msra.mxu0 0.0
    %1113 = vmatprep.subr.mxu0 0.0
    %1114 = vmatpush1.msra.mxu0 0.0
    %1115 = vmatprep.mubr.f32.mxu0 0.0
    %1116 = vmatmul.mubr.f32.gmra.mrb[0].mxu0 %v1049
    %v1117 = vpop.f32.mrb[0].mxu0
    %v1118 = vadd.f32 0.0, %v1117
    %v1119 = vpop.f32.mrb[0].mxu0
    %1120 = vdwg.mxu0
    %v1121 = vadd.f32 %v1043, %v1118
    %v1122 = vtanh.pop %v1121
    %v1123 = vmul.f32 %v1122, 0.5
    %v1124 = vadd.f32 %v1123, 0.5
    %v1125 = vmul.f32 %v1124, %v871
    %1127 = vrot.lane.b32.xlu0 %v1122, 64
    %v1128 = vpop.permute.xlu0 %1127
    %v1130 = vmul.f32 %v1124, %v1128
    %1132 = vrot.lane.b32.xlu0 %v1130, 32
    %v1133 = vpop.permute.xlu0 %1132
    %v1135 = vadd.f32 %v1125, %v1133
    %v1136 = vtanh.pop %v1135
    %1138 = vrot.lane.b32.xlu0 %v1136, 64
    %v1139 = vpop.permute.xlu0 %1138
    %v1141 = vmul.f32 %v1124, %v1139
    %s1142 = scalar_lea.vmem [#allocation3], 32
    %v1143 = vld [vmem:[%s1142] sm:$0xff]
    %1144 = vmatprep.subr.mxu0 0.0
    %1145 = vmatpush1.msra.mxu0 %v69
    %1146 = vmatprep.subr.mxu0 0.0
    %1147 = vmatpush1.msra.mxu0 %v70
    %1148 = vmatprep.subr.mxu0 0.0
    %1149 = vmatpush1.msra.mxu0 %v71
    %1150 = vmatprep.subr.mxu0 0.0
    %1151 = vmatpush1.msra.mxu0 %v72
    %1152 = vmatprep.subr.mxu0 0.0
    %1153 = vmatpush1.msra.mxu0 0.0
    %1154 = vmatprep.subr.mxu0 0.0
    %1155 = vmatpush1.msra.mxu0 0.0
    %1156 = vmatprep.subr.mxu0 0.0
    %1157 = vmatpush1.msra.mxu0 0.0
    %1158 = vmatprep.subr.mxu0 0.0
    %1159 = vmatpush1.msra.mxu0 0.0
    %1160 = vmatprep.subr.mxu0 0.0
    %1161 = vmatpush1.msra.mxu0 0.0
    %1162 = vmatprep.subr.mxu0 0.0
    %1163 = vmatpush1.msra.mxu0 0.0
    %1164 = vmatprep.subr.mxu0 0.0
    %1165 = vmatpush1.msra.mxu0 0.0
    %1166 = vmatprep.subr.mxu0 0.0
    %1167 = vmatpush1.msra.mxu0 0.0
    %1168 = vmatprep.subr.mxu0 0.0
    %1169 = vmatpush1.msra.mxu0 0.0
    %1170 = vmatprep.subr.mxu0 0.0
    %1171 = vmatpush1.msra.mxu0 0.0
    %1172 = vmatprep.subr.mxu0 0.0
    %1173 = vmatpush1.msra.mxu0 0.0
    %1174 = vmatprep.subr.mxu0 0.0
    %1175 = vmatpush1.msra.mxu0 0.0
    %1176 = vmatprep.subr.mxu0 0.0
    %1177 = vmatpush1.msra.mxu0 0.0
    %1178 = vmatprep.subr.mxu0 0.0
    %1179 = vmatpush1.msra.mxu0 0.0
    %1180 = vmatprep.subr.mxu0 0.0
    %1181 = vmatpush1.msra.mxu0 0.0
    %1182 = vmatprep.subr.mxu0 0.0
    %1183 = vmatpush1.msra.mxu0 0.0
    %1184 = vmatprep.subr.mxu0 0.0
    %1185 = vmatpush1.msra.mxu0 0.0
    %1186 = vmatprep.subr.mxu0 0.0
    %1187 = vmatpush1.msra.mxu0 0.0
    %1188 = vmatprep.subr.mxu0 0.0
    %1189 = vmatpush1.msra.mxu0 0.0
    %1190 = vmatprep.subr.mxu0 0.0
    %1191 = vmatpush1.msra.mxu0 0.0
    %1192 = vmatprep.subr.mxu0 0.0
    %1193 = vmatpush1.msra.mxu0 0.0
    %1194 = vmatprep.subr.mxu0 0.0
    %1195 = vmatpush1.msra.mxu0 0.0
    %1196 = vmatprep.subr.mxu0 0.0
    %1197 = vmatpush1.msra.mxu0 0.0
    %1198 = vmatprep.subr.mxu0 0.0
    %1199 = vmatpush1.msra.mxu0 0.0
    %1200 = vmatprep.subr.mxu0 0.0
    %1201 = vmatpush1.msra.mxu0 0.0
    %1202 = vmatprep.subr.mxu0 0.0
    %1203 = vmatpush1.msra.mxu0 0.0
    %1204 = vmatprep.subr.mxu0 0.0
    %1205 = vmatpush1.msra.mxu0 0.0
    %1206 = vmatprep.subr.mxu0 0.0
    %1207 = vmatpush1.msra.mxu0 0.0
    %1208 = vmatprep.mubr.f32.mxu0 0.0
    %1209 = vmatmul.mubr.f32.gmra.mrb[0].mxu0 %v1049
    %v1210 = vpop.f32.mrb[0].mxu0
    %v1211 = vadd.f32 0.0, %v1210
    %v1212 = vpop.f32.mrb[0].mxu0
    %1213 = vdwg.mxu0
    %v1214 = vadd.f32 %v1143, %v1211
    %v1215 = vtanh.pop %v1214
    %v1216 = vmul.f32 %v1215, 0.5
    %v1217 = vadd.f32 %v1216, 0.5
    %v1218 = vmul.f32 %v1217, %v964
    %1220 = vrot.lane.b32.xlu0 %v1215, 64
    %v1221 = vpop.permute.xlu0 %1220
    %v1223 = vmul.f32 %v1217, %v1221
    %1225 = vrot.lane.b32.xlu0 %v1223, 32
    %v1226 = vpop.permute.xlu0 %1225
    %v1228 = vadd.f32 %v1218, %v1226
    %v1229 = vtanh.pop %v1228
    %1231 = vrot.lane.b32.xlu0 %v1229, 64
    %v1232 = vpop.permute.xlu0 %1231
    %v1234 = vmul.f32 %v1217, %v1232
    %1236 = vrot.lane.b32.xlu0 %v1141, 32
    %v1237 = vpop.permute.xlu0 %1236
    %v1238 = vsel %vm89, %v1237, 0
    %1240 = vmatprep.subr.mxu0 0.0
    %1241 = vmatpush1.msra.mxu0 %v77
    %1242 = vmatprep.subr.mxu0 0.0
    %1243 = vmatpush1.msra.mxu0 %v78
    %1244 = vmatprep.subr.mxu0 0.0
    %1245 = vmatpush1.msra.mxu0 %v79
    %1246 = vmatprep.subr.mxu0 0.0
    %1247 = vmatpush1.msra.mxu0 %v80
    %1248 = vmatprep.subr.mxu0 0.0
    %1249 = vmatpush1.msra.mxu0 0.0
    %1250 = vmatprep.subr.mxu0 0.0
    %1251 = vmatpush1.msra.mxu0 0.0
    %1252 = vmatprep.subr.mxu0 0.0
    %1253 = vmatpush1.msra.mxu0 0.0
    %1254 = vmatprep.subr.mxu0 0.0
    %1255 = vmatpush1.msra.mxu0 0.0
    %1256 = vmatprep.subr.mxu0 0.0
    %1257 = vmatpush1.msra.mxu0 0.0
    %1258 = vmatprep.subr.mxu0 0.0
    %1259 = vmatpush1.msra.mxu0 0.0
    %1260 = vmatprep.subr.mxu0 0.0
    %1261 = vmatpush1.msra.mxu0 0.0
    %1262 = vmatprep.subr.mxu0 0.0
    %1263 = vmatpush1.msra.mxu0 0.0
    %1264 = vmatprep.subr.mxu0 0.0
    %1265 = vmatpush1.msra.mxu0 0.0
    %1266 = vmatprep.subr.mxu0 0.0
    %1267 = vmatpush1.msra.mxu0 0.0
    %1268 = vmatprep.subr.mxu0 0.0
    %1269 = vmatpush1.msra.mxu0 0.0
    %1270 = vmatprep.subr.mxu0 0.0
    %1271 = vmatpush1.msra.mxu0 0.0
    %1272 = vmatprep.subr.mxu0 0.0
    %1273 = vmatpush1.msra.mxu0 0.0
    %1274 = vmatprep.subr.mxu0 0.0
    %1275 = vmatpush1.msra.mxu0 0.0
    %1276 = vmatprep.subr.mxu0 0.0
    %1277 = vmatpush1.msra.mxu0 0.0
    %1278 = vmatprep.subr.mxu0 0.0
    %1279 = vmatpush1.msra.mxu0 0.0
    %1280 = vmatprep.subr.mxu0 0.0
    %1281 = vmatpush1.msra.mxu0 0.0
    %1282 = vmatprep.subr.mxu0 0.0
    %1283 = vmatpush1.msra.mxu0 0.0
    %1284 = vmatprep.subr.mxu0 0.0
    %1285 = vmatpush1.msra.mxu0 0.0
    %1286 = vmatprep.subr.mxu0 0.0
    %1287 = vmatpush1.msra.mxu0 0.0
    %1288 = vmatprep.subr.mxu0 0.0
    %1289 = vmatpush1.msra.mxu0 0.0
    %1290 = vmatprep.subr.mxu0 0.0
    %1291 = vmatpush1.msra.mxu0 0.0
    %1292 = vmatprep.subr.mxu0 0.0
    %1293 = vmatpush1.msra.mxu0 0.0
    %1294 = vmatprep.subr.mxu0 0.0
    %1295 = vmatpush1.msra.mxu0 0.0
    %1296 = vmatprep.subr.mxu0 0.0
    %1297 = vmatpush1.msra.mxu0 0.0
    %1298 = vmatprep.subr.mxu0 0.0
    %1299 = vmatpush1.msra.mxu0 0.0
    %1300 = vmatprep.subr.mxu0 0.0
    %1301 = vmatpush1.msra.mxu0 0.0
    %1302 = vmatprep.subr.mxu0 0.0
    %1303 = vmatpush1.msra.mxu0 0.0
    %1304 = vmatprep.mubr.f32.mxu0 0.0
    %1305 = vmatmul.mubr.f32.gmra.mrb[0].mxu0 %v1238
    %v1306 = vpop.f32.mrb[0].mxu0
    %v1307 = vadd.f32 %v86, %v1306
    %v1308 = vpop.f32.mrb[0].mxu0
    %1309 = vdwg.mxu0
    %1311 = vrot.lane.b32.xlu0 %v1234, 32
    %v1312 = vpop.permute.xlu0 %1311
    %v1313 = vsel %vm89, %v1312, 0
    %1315 = vmatprep.subr.mxu0 0.0
    %1316 = vmatpush1.msra.mxu0 %v73
    %1317 = vmatprep.subr.mxu0 0.0
    %1318 = vmatpush1.msra.mxu0 %v74
    %1319 = vmatprep.subr.mxu0 0.0
    %1320 = vmatpush1.msra.mxu0 %v75
    %1321 = vmatprep.subr.mxu0 0.0
    %1322 = vmatpush1.msra.mxu0 %v76
    %1323 = vmatprep.subr.mxu0 0.0
    %1324 = vmatpush1.msra.mxu0 0.0
    %1325 = vmatprep.subr.mxu0 0.0
    %1326 = vmatpush1.msra.mxu0 0.0
    %1327 = vmatprep.subr.mxu0 0.0
    %1328 = vmatpush1.msra.mxu0 0.0
    %1329 = vmatprep.subr.mxu0 0.0
    %1330 = vmatpush1.msra.mxu0 0.0
    %1331 = vmatprep.subr.mxu0 0.0
    %1332 = vmatpush1.msra.mxu0 0.0
    %1333 = vmatprep.subr.mxu0 0.0
    %1334 = vmatpush1.msra.mxu0 0.0
    %1335 = vmatprep.subr.mxu0 0.0
    %1336 = vmatpush1.msra.mxu0 0.0
    %1337 = vmatprep.subr.mxu0 0.0
    %1338 = vmatpush1.msra.mxu0 0.0
    %1339 = vmatprep.subr.mxu0 0.0
    %1340 = vmatpush1.msra.mxu0 0.0
    %1341 = vmatprep.subr.mxu0 0.0
    %1342 = vmatpush1.msra.mxu0 0.0
    %1343 = vmatprep.subr.mxu0 0.0
    %1344 = vmatpush1.msra.mxu0 0.0
    %1345 = vmatprep.subr.mxu0 0.0
    %1346 = vmatpush1.msra.mxu0 0.0
    %1347 = vmatprep.subr.mxu0 0.0
    %1348 = vmatpush1.msra.mxu0 0.0
    %1349 = vmatprep.subr.mxu0 0.0
    %1350 = vmatpush1.msra.mxu0 0.0
    %1351 = vmatprep.subr.mxu0 0.0
    %1352 = vmatpush1.msra.mxu0 0.0
    %1353 = vmatprep.subr.mxu0 0.0
    %1354 = vmatpush1.msra.mxu0 0.0
    %1355 = vmatprep.subr.mxu0 0.0
    %1356 = vmatpush1.msra.mxu0 0.0
    %1357 = vmatprep.subr.mxu0 0.0
    %1358 = vmatpush1.msra.mxu0 0.0
    %1359 = vmatprep.subr.mxu0 0.0
    %1360 = vmatpush1.msra.mxu0 0.0
    %1361 = vmatprep.subr.mxu0 0.0
    %1362 = vmatpush1.msra.mxu0 0.0
    %1363 = vmatprep.subr.mxu0 0.0
    %1364 = vmatpush1.msra.mxu0 0.0
    %1365 = vmatprep.subr.mxu0 0.0
    %1366 = vmatpush1.msra.mxu0 0.0
    %1367 = vmatprep.subr.mxu0 0.0
    %1368 = vmatpush1.msra.mxu0 0.0
    %1369 = vmatprep.subr.mxu0 0.0
    %1370 = vmatpush1.msra.mxu0 0.0
    %1371 = vmatprep.subr.mxu0 0.0
    %1372 = vmatpush1.msra.mxu0 0.0
    %1373 = vmatprep.subr.mxu0 0.0
    %1374 = vmatpush1.msra.mxu0 0.0
    %1375 = vmatprep.subr.mxu0 0.0
    %1376 = vmatpush1.msra.mxu0 0.0
    %1377 = vmatprep.subr.mxu0 0.0
    %1378 = vmatpush1.msra.mxu0 0.0
    %1379 = vmatprep.mubr.f32.mxu0 0.0
    %1380 = vmatmul.mubr.f32.gmra.mrb[0].mxu0 %v1313
    %v1381 = vpop.f32.mrb[0].mxu0
    %v1382 = vadd.f32 0.0, %v1381
    %v1383 = vpop.f32.mrb[0].mxu0
    %1384 = vdwg.mxu0
    %v1385 = vadd.f32 %v1307, %v1382
    %v1386 = vtanh.pop %v1385
    %v1387 = vmul.f32 %v1386, 0.5
    %v1388 = vadd.f32 %v1387, 0.5
    %v1389 = vmul.f32 %v1388, %v1135
    %1391 = vrot.lane.b32.xlu0 %v1386, 64
    %v1392 = vpop.permute.xlu0 %1391
    %v1394 = vmul.f32 %v1388, %v1392
    %1396 = vrot.lane.b32.xlu0 %v1394, 32
    %v1397 = vpop.permute.xlu0 %1396
    %v1399 = vadd.f32 %v1389, %v1397
    %v1400 = vtanh.pop %v1399
    %1402 = vrot.lane.b32.xlu0 %v1400, 64
    %v1403 = vpop.permute.xlu0 %1402
    %v1405 = vmul.f32 %v1388, %v1403
    %s1406 = scalar_lea.vmem [#allocation3], 40
    %v1407 = vld [vmem:[%s1406] sm:$0xff]
    %1408 = vmatprep.subr.mxu0 0.0
    %1409 = vmatpush1.msra.mxu0 %v69
    %1410 = vmatprep.subr.mxu0 0.0
    %1411 = vmatpush1.msra.mxu0 %v70
    %1412 = vmatprep.subr.mxu0 0.0
    %1413 = vmatpush1.msra.mxu0 %v71
    %1414 = vmatprep.subr.mxu0 0.0
    %1415 = vmatpush1.msra.mxu0 %v72
    %1416 = vmatprep.subr.mxu0 0.0
    %1417 = vmatpush1.msra.mxu0 0.0
    %1418 = vmatprep.subr.mxu0 0.0
    %1419 = vmatpush1.msra.mxu0 0.0
    %1420 = vmatprep.subr.mxu0 0.0
    %1421 = vmatpush1.msra.mxu0 0.0
    %1422 = vmatprep.subr.mxu0 0.0
    %1423 = vmatpush1.msra.mxu0 0.0
    %1424 = vmatprep.subr.mxu0 0.0
    %1425 = vmatpush1.msra.mxu0 0.0
    %1426 = vmatprep.subr.mxu0 0.0
    %1427 = vmatpush1.msra.mxu0 0.0
    %1428 = vmatprep.subr.mxu0 0.0
    %1429 = vmatpush1.msra.mxu0 0.0
    %1430 = vmatprep.subr.mxu0 0.0
    %1431 = vmatpush1.msra.mxu0 0.0
    %1432 = vmatprep.subr.mxu0 0.0
    %1433 = vmatpush1.msra.mxu0 0.0
    %1434 = vmatprep.subr.mxu0 0.0
    %1435 = vmatpush1.msra.mxu0 0.0
    %1436 = vmatprep.subr.mxu0 0.0
    %1437 = vmatpush1.msra.mxu0 0.0
    %1438 = vmatprep.subr.mxu0 0.0
    %1439 = vmatpush1.msra.mxu0 0.0
    %1440 = vmatprep.subr.mxu0 0.0
    %1441 = vmatpush1.msra.mxu0 0.0
    %1442 = vmatprep.subr.mxu0 0.0
    %1443 = vmatpush1.msra.mxu0 0.0
    %1444 = vmatprep.subr.mxu0 0.0
    %1445 = vmatpush1.msra.mxu0 0.0
    %1446 = vmatprep.subr.mxu0 0.0
    %1447 = vmatpush1.msra.mxu0 0.0
    %1448 = vmatprep.subr.mxu0 0.0
    %1449 = vmatpush1.msra.mxu0 0.0
    %1450 = vmatprep.subr.mxu0 0.0
    %1451 = vmatpush1.msra.mxu0 0.0
    %1452 = vmatprep.subr.mxu0 0.0
    %1453 = vmatpush1.msra.mxu0 0.0
    %1454 = vmatprep.subr.mxu0 0.0
    %1455 = vmatpush1.msra.mxu0 0.0
    %1456 = vmatprep.subr.mxu0 0.0
    %1457 = vmatpush1.msra.mxu0 0.0
    %1458 = vmatprep.subr.mxu0 0.0
    %1459 = vmatpush1.msra.mxu0 0.0
    %1460 = vmatprep.subr.mxu0 0.0
    %1461 = vmatpush1.msra.mxu0 0.0
    %1462 = vmatprep.subr.mxu0 0.0
    %1463 = vmatpush1.msra.mxu0 0.0
    %1464 = vmatprep.subr.mxu0 0.0
    %1465 = vmatpush1.msra.mxu0 0.0
    %1466 = vmatprep.subr.mxu0 0.0
    %1467 = vmatpush1.msra.mxu0 0.0
    %1468 = vmatprep.subr.mxu0 0.0
    %1469 = vmatpush1.msra.mxu0 0.0
    %1470 = vmatprep.subr.mxu0 0.0
    %1471 = vmatpush1.msra.mxu0 0.0
    %1472 = vmatprep.mubr.f32.mxu0 0.0
    %1473 = vmatmul.mubr.f32.gmra.mrb[0].mxu0 %v1313
    %v1474 = vpop.f32.mrb[0].mxu0
    %v1475 = vadd.f32 0.0, %v1474
    %v1476 = vpop.f32.mrb[0].mxu0
    %1477 = vdwg.mxu0
    %v1478 = vadd.f32 %v1407, %v1475
    %v1479 = vtanh.pop %v1478
    %v1480 = vmul.f32 %v1479, 0.5
    %v1481 = vadd.f32 %v1480, 0.5
    %v1482 = vmul.f32 %v1481, %v1228
    %1484 = vrot.lane.b32.xlu0 %v1479, 64
    %v1485 = vpop.permute.xlu0 %1484
    %v1487 = vmul.f32 %v1481, %v1485
    %1489 = vrot.lane.b32.xlu0 %v1487, 32
    %v1490 = vpop.permute.xlu0 %1489
    %v1492 = vadd.f32 %v1482, %v1490
    %v1493 = vtanh.pop %v1492
    %1495 = vrot.lane.b32.xlu0 %v1493, 64
    %v1496 = vpop.permute.xlu0 %1495
    %v1498 = vmul.f32 %v1481, %v1496
    %1500 = vrot.lane.b32.xlu0 %v1405, 32
    %v1501 = vpop.permute.xlu0 %1500
    %v1502 = vsel %vm89, %v1501, 0
    %1504 = vmatprep.subr.mxu0 0.0
    %1505 = vmatpush1.msra.mxu0 %v77
    %1506 = vmatprep.subr.mxu0 0.0
    %1507 = vmatpush1.msra.mxu0 %v78
    %1508 = vmatprep.subr.mxu0 0.0
    %1509 = vmatpush1.msra.mxu0 %v79
    %1510 = vmatprep.subr.mxu0 0.0
    %1511 = vmatpush1.msra.mxu0 %v80
    %1512 = vmatprep.subr.mxu0 0.0
    %1513 = vmatpush1.msra.mxu0 0.0
    %1514 = vmatprep.subr.mxu0 0.0
    %1515 = vmatpush1.msra.mxu0 0.0
    %1516 = vmatprep.subr.mxu0 0.0
    %1517 = vmatpush1.msra.mxu0 0.0
    %1518 = vmatprep.subr.mxu0 0.0
    %1519 = vmatpush1.msra.mxu0 0.0
    %1520 = vmatprep.subr.mxu0 0.0
    %1521 = vmatpush1.msra.mxu0 0.0
    %1522 = vmatprep.subr.mxu0 0.0
    %1523 = vmatpush1.msra.mxu0 0.0
    %1524 = vmatprep.subr.mxu0 0.0
    %1525 = vmatpush1.msra.mxu0 0.0
    %1526 = vmatprep.subr.mxu0 0.0
    %1527 = vmatpush1.msra.mxu0 0.0
    %1528 = vmatprep.subr.mxu0 0.0
    %1529 = vmatpush1.msra.mxu0 0.0
    %1530 = vmatprep.subr.mxu0 0.0
    %1531 = vmatpush1.msra.mxu0 0.0
    %1532 = vmatprep.subr.mxu0 0.0
    %1533 = vmatpush1.msra.mxu0 0.0
    %1534 = vmatprep.subr.mxu0 0.0
    %1535 = vmatpush1.msra.mxu0 0.0
    %1536 = vmatprep.subr.mxu0 0.0
    %1537 = vmatpush1.msra.mxu0 0.0
    %1538 = vmatprep.subr.mxu0 0.0
    %1539 = vmatpush1.msra.mxu0 0.0
    %1540 = vmatprep.subr.mxu0 0.0
    %1541 = vmatpush1.msra.mxu0 0.0
    %1542 = vmatprep.subr.mxu0 0.0
    %1543 = vmatpush1.msra.mxu0 0.0
    %1544 = vmatprep.subr.mxu0 0.0
    %1545 = vmatpush1.msra.mxu0 0.0
    %1546 = vmatprep.subr.mxu0 0.0
    %1547 = vmatpush1.msra.mxu0 0.0
    %1548 = vmatprep.subr.mxu0 0.0
    %1549 = vmatpush1.msra.mxu0 0.0
    %1550 = vmatprep.subr.mxu0 0.0
    %1551 = vmatpush1.msra.mxu0 0.0
    %1552 = vmatprep.subr.mxu0 0.0
    %1553 = vmatpush1.msra.mxu0 0.0
    %1554 = vmatprep.subr.mxu0 0.0
    %1555 = vmatpush1.msra.mxu0 0.0
    %1556 = vmatprep.subr.mxu0 0.0
    %1557 = vmatpush1.msra.mxu0 0.0
    %1558 = vmatprep.subr.mxu0 0.0
    %1559 = vmatpush1.msra.mxu0 0.0
    %1560 = vmatprep.subr.mxu0 0.0
    %1561 = vmatpush1.msra.mxu0 0.0
    %1562 = vmatprep.subr.mxu0 0.0
    %1563 = vmatpush1.msra.mxu0 0.0
    %1564 = vmatprep.subr.mxu0 0.0
    %1565 = vmatpush1.msra.mxu0 0.0
    %1566 = vmatprep.subr.mxu0 0.0
    %1567 = vmatpush1.msra.mxu0 0.0
    %1568 = vmatprep.mubr.f32.mxu0 0.0
    %1569 = vmatmul.mubr.f32.gmra.mrb[0].mxu0 %v1502
    %v1570 = vpop.f32.mrb[0].mxu0
    %v1571 = vadd.f32 %v86, %v1570
    %v1572 = vpop.f32.mrb[0].mxu0
    %1573 = vdwg.mxu0
    %1575 = vrot.lane.b32.xlu0 %v1498, 32
    %v1576 = vpop.permute.xlu0 %1575
    %v1577 = vsel %vm89, %v1576, 0
    %1579 = vmatprep.subr.mxu0 0.0
    %1580 = vmatpush1.msra.mxu0 %v73
    %1581 = vmatprep.subr.mxu0 0.0
    %1582 = vmatpush1.msra.mxu0 %v74
    %1583 = vmatprep.subr.mxu0 0.0
    %1584 = vmatpush1.msra.mxu0 %v75
    %1585 = vmatprep.subr.mxu0 0.0
    %1586 = vmatpush1.msra.mxu0 %v76
    %1587 = vmatprep.subr.mxu0 0.0
    %1588 = vmatpush1.msra.mxu0 0.0
    %1589 = vmatprep.subr.mxu0 0.0
    %1590 = vmatpush1.msra.mxu0 0.0
    %1591 = vmatprep.subr.mxu0 0.0
    %1592 = vmatpush1.msra.mxu0 0.0
    %1593 = vmatprep.subr.mxu0 0.0
    %1594 = vmatpush1.msra.mxu0 0.0
    %1595 = vmatprep.subr.mxu0 0.0
    %1596 = vmatpush1.msra.mxu0 0.0
    %1597 = vmatprep.subr.mxu0 0.0
    %1598 = vmatpush1.msra.mxu0 0.0
    %1599 = vmatprep.subr.mxu0 0.0
    %1600 = vmatpush1.msra.mxu0 0.0
    %1601 = vmatprep.subr.mxu0 0.0
    %1602 = vmatpush1.msra.mxu0 0.0
    %1603 = vmatprep.subr.mxu0 0.0
    %1604 = vmatpush1.msra.mxu0 0.0
    %1605 = vmatprep.subr.mxu0 0.0
    %1606 = vmatpush1.msra.mxu0 0.0
    %1607 = vmatprep.subr.mxu0 0.0
    %1608 = vmatpush1.msra.mxu0 0.0
    %1609 = vmatprep.subr.mxu0 0.0
    %1610 = vmatpush1.msra.mxu0 0.0
    %1611 = vmatprep.subr.mxu0 0.0
    %1612 = vmatpush1.msra.mxu0 0.0
    %1613 = vmatprep.subr.mxu0 0.0
    %1614 = vmatpush1.msra.mxu0 0.0
    %1615 = vmatprep.subr.mxu0 0.0
    %1616 = vmatpush1.msra.mxu0 0.0
    %1617 = vmatprep.subr.mxu0 0.0
    %1618 = vmatpush1.msra.mxu0 0.0
    %1619 = vmatprep.subr.mxu0 0.0
    %1620 = vmatpush1.msra.mxu0 0.0
    %1621 = vmatprep.subr.mxu0 0.0
    %1622 = vmatpush1.msra.mxu0 0.0
    %1623 = vmatprep.subr.mxu0 0.0
    %1624 = vmatpush1.msra.mxu0 0.0
    %1625 = vmatprep.subr.mxu0 0.0
    %1626 = vmatpush1.msra.mxu0 0.0
    %1627 = vmatprep.subr.mxu0 0.0
    %1628 = vmatpush1.msra.mxu0 0.0
    %1629 = vmatprep.subr.mxu0 0.0
    %1630 = vmatpush1.msra.mxu0 0.0
    %1631 = vmatprep.subr.mxu0 0.0
    %1632 = vmatpush1.msra.mxu0 0.0
    %1633 = vmatprep.subr.mxu0 0.0
    %1634 = vmatpush1.msra.mxu0 0.0
    %1635 = vmatprep.subr.mxu0 0.0
    %1636 = vmatpush1.msra.mxu0 0.0
    %1637 = vmatprep.subr.mxu0 0.0
    %1638 = vmatpush1.msra.mxu0 0.0
    %1639 = vmatprep.subr.mxu0 0.0
    %1640 = vmatpush1.msra.mxu0 0.0
    %1641 = vmatprep.subr.mxu0 0.0
    %1642 = vmatpush1.msra.mxu0 0.0
    %1643 = vmatprep.mubr.f32.mxu0 0.0
    %1644 = vmatmul.mubr.f32.gmra.mrb[0].mxu0 %v1577
    %v1645 = vpop.f32.mrb[0].mxu0
    %v1646 = vadd.f32 0.0, %v1645
    %v1647 = vpop.f32.mrb[0].mxu0
    %1648 = vdwg.mxu0
    %v1649 = vadd.f32 %v1571, %v1646
    %v1650 = vtanh.pop %v1649
    %v1651 = vmul.f32 %v1650, 0.5
    %v1652 = vadd.f32 %v1651, 0.5
    %v1653 = vmul.f32 %v1652, %v1399
    %1655 = vrot.lane.b32.xlu0 %v1650, 64
    %v1656 = vpop.permute.xlu0 %1655
    %v1658 = vmul.f32 %v1652, %v1656
    %1660 = vrot.lane.b32.xlu0 %v1658, 32
    %v1661 = vpop.permute.xlu0 %1660
    %v1663 = vadd.f32 %v1653, %v1661
    %v1664 = vtanh.pop %v1663
    %1666 = vrot.lane.b32.xlu0 %v1664, 64
    %v1667 = vpop.permute.xlu0 %1666
    %v1669 = vmul.f32 %v1652, %v1667
    %s1670 = scalar_lea.vmem [#allocation3], 48
    %v1671 = vld [vmem:[%s1670] sm:$0xff]
    %1672 = vmatprep.subr.mxu0 0.0
    %1673 = vmatpush1.msra.mxu0 %v69
    %1674 = vmatprep.subr.mxu0 0.0
    %1675 = vmatpush1.msra.mxu0 %v70
    %1676 = vmatprep.subr.mxu0 0.0
    %1677 = vmatpush1.msra.mxu0 %v71
    %1678 = vmatprep.subr.mxu0 0.0
    %1679 = vmatpush1.msra.mxu0 %v72
    %1680 = vmatprep.subr.mxu0 0.0
    %1681 = vmatpush1.msra.mxu0 0.0
    %1682 = vmatprep.subr.mxu0 0.0
    %1683 = vmatpush1.msra.mxu0 0.0
    %1684 = vmatprep.subr.mxu0 0.0
    %1685 = vmatpush1.msra.mxu0 0.0
    %1686 = vmatprep.subr.mxu0 0.0
    %1687 = vmatpush1.msra.mxu0 0.0
    %1688 = vmatprep.subr.mxu0 0.0
    %1689 = vmatpush1.msra.mxu0 0.0
    %1690 = vmatprep.subr.mxu0 0.0
    %1691 = vmatpush1.msra.mxu0 0.0
    %1692 = vmatprep.subr.mxu0 0.0
    %1693 = vmatpush1.msra.mxu0 0.0
    %1694 = vmatprep.subr.mxu0 0.0
    %1695 = vmatpush1.msra.mxu0 0.0
    %1696 = vmatprep.subr.mxu0 0.0
    %1697 = vmatpush1.msra.mxu0 0.0
    %1698 = vmatprep.subr.mxu0 0.0
    %1699 = vmatpush1.msra.mxu0 0.0
    %1700 = vmatprep.subr.mxu0 0.0
    %1701 = vmatpush1.msra.mxu0 0.0
    %1702 = vmatprep.subr.mxu0 0.0
    %1703 = vmatpush1.msra.mxu0 0.0
    %1704 = vmatprep.subr.mxu0 0.0
    %1705 = vmatpush1.msra.mxu0 0.0
    %1706 = vmatprep.subr.mxu0 0.0
    %1707 = vmatpush1.msra.mxu0 0.0
    %1708 = vmatprep.subr.mxu0 0.0
    %1709 = vmatpush1.msra.mxu0 0.0
    %1710 = vmatprep.subr.mxu0 0.0
    %1711 = vmatpush1.msra.mxu0 0.0
    %1712 = vmatprep.subr.mxu0 0.0
    %1713 = vmatpush1.msra.mxu0 0.0
    %1714 = vmatprep.subr.mxu0 0.0
    %1715 = vmatpush1.msra.mxu0 0.0
    %1716 = vmatprep.subr.mxu0 0.0
    %1717 = vmatpush1.msra.mxu0 0.0
    %1718 = vmatprep.subr.mxu0 0.0
    %1719 = vmatpush1.msra.mxu0 0.0
    %1720 = vmatprep.subr.mxu0 0.0
    %1721 = vmatpush1.msra.mxu0 0.0
    %1722 = vmatprep.subr.mxu0 0.0
    %1723 = vmatpush1.msra.mxu0 0.0
    %1724 = vmatprep.subr.mxu0 0.0
    %1725 = vmatpush1.msra.mxu0 0.0
    %1726 = vmatprep.subr.mxu0 0.0
    %1727 = vmatpush1.msra.mxu0 0.0
    %1728 = vmatprep.subr.mxu0 0.0
    %1729 = vmatpush1.msra.mxu0 0.0
    %1730 = vmatprep.subr.mxu0 0.0
    %1731 = vmatpush1.msra.mxu0 0.0
    %1732 = vmatprep.subr.mxu0 0.0
    %1733 = vmatpush1.msra.mxu0 0.0
    %1734 = vmatprep.subr.mxu0 0.0
    %1735 = vmatpush1.msra.mxu0 0.0
    %1736 = vmatprep.mubr.f32.mxu0 0.0
    %1737 = vmatmul.mubr.f32.gmra.mrb[0].mxu0 %v1577
    %v1738 = vpop.f32.mrb[0].mxu0
    %v1739 = vadd.f32 0.0, %v1738
    %v1740 = vpop.f32.mrb[0].mxu0
    %1741 = vdwg.mxu0
    %v1742 = vadd.f32 %v1671, %v1739
    %v1743 = vtanh.pop %v1742
    %v1744 = vmul.f32 %v1743, 0.5
    %v1745 = vadd.f32 %v1744, 0.5
    %v1746 = vmul.f32 %v1745, %v1492
    %1748 = vrot.lane.b32.xlu0 %v1743, 64
    %v1749 = vpop.permute.xlu0 %1748
    %v1751 = vmul.f32 %v1745, %v1749
    %1753 = vrot.lane.b32.xlu0 %v1751, 32
    %v1754 = vpop.permute.xlu0 %1753
    %v1756 = vadd.f32 %v1746, %v1754
    %v1757 = vtanh.pop %v1756
    %1759 = vrot.lane.b32.xlu0 %v1757, 64
    %v1760 = vpop.permute.xlu0 %1759
    %v1762 = vmul.f32 %v1745, %v1760
    %1764 = vrot.lane.b32.xlu0 %v1669, 32
    %v1765 = vpop.permute.xlu0 %1764
    %v1766 = vsel %vm89, %v1765, 0
    %1768 = vmatprep.subr.mxu0 0.0
    %1769 = vmatpush1.msra.mxu0 %v77
    %1770 = vmatprep.subr.mxu0 0.0
    %1771 = vmatpush1.msra.mxu0 %v78
    %1772 = vmatprep.subr.mxu0 0.0
    %1773 = vmatpush1.msra.mxu0 %v79
    %1774 = vmatprep.subr.mxu0 0.0
    %1775 = vmatpush1.msra.mxu0 %v80
    %1776 = vmatprep.subr.mxu0 0.0
    %1777 = vmatpush1.msra.mxu0 0.0
    %1778 = vmatprep.subr.mxu0 0.0
    %1779 = vmatpush1.msra.mxu0 0.0
    %1780 = vmatprep.subr.mxu0 0.0
    %1781 = vmatpush1.msra.mxu0 0.0
    %1782 = vmatprep.subr.mxu0 0.0
    %1783 = vmatpush1.msra.mxu0 0.0
    %1784 = vmatprep.subr.mxu0 0.0
    %1785 = vmatpush1.msra.mxu0 0.0
    %1786 = vmatprep.subr.mxu0 0.0
    %1787 = vmatpush1.msra.mxu0 0.0
    %1788 = vmatprep.subr.mxu0 0.0
    %1789 = vmatpush1.msra.mxu0 0.0
    %1790 = vmatprep.subr.mxu0 0.0
    %1791 = vmatpush1.msra.mxu0 0.0
    %1792 = vmatprep.subr.mxu0 0.0
    %1793 = vmatpush1.msra.mxu0 0.0
    %1794 = vmatprep.subr.mxu0 0.0
    %1795 = vmatpush1.msra.mxu0 0.0
    %1796 = vmatprep.subr.mxu0 0.0
    %1797 = vmatpush1.msra.mxu0 0.0
    %1798 = vmatprep.subr.mxu0 0.0
    %1799 = vmatpush1.msra.mxu0 0.0
    %1800 = vmatprep.subr.mxu0 0.0
    %1801 = vmatpush1.msra.mxu0 0.0
    %1802 = vmatprep.subr.mxu0 0.0
    %1803 = vmatpush1.msra.mxu0 0.0
    %1804 = vmatprep.subr.mxu0 0.0
    %1805 = vmatpush1.msra.mxu0 0.0
    %1806 = vmatprep.subr.mxu0 0.0
    %1807 = vmatpush1.msra.mxu0 0.0
    %1808 = vmatprep.subr.mxu0 0.0
    %1809 = vmatpush1.msra.mxu0 0.0
    %1810 = vmatprep.subr.mxu0 0.0
    %1811 = vmatpush1.msra.mxu0 0.0
    %1812 = vmatprep.subr.mxu0 0.0
    %1813 = vmatpush1.msra.mxu0 0.0
    %1814 = vmatprep.subr.mxu0 0.0
    %1815 = vmatpush1.msra.mxu0 0.0
    %1816 = vmatprep.subr.mxu0 0.0
    %1817 = vmatpush1.msra.mxu0 0.0
    %1818 = vmatprep.subr.mxu0 0.0
    %1819 = vmatpush1.msra.mxu0 0.0
    %1820 = vmatprep.subr.mxu0 0.0
    %1821 = vmatpush1.msra.mxu0 0.0
    %1822 = vmatprep.subr.mxu0 0.0
    %1823 = vmatpush1.msra.mxu0 0.0
    %1824 = vmatprep.subr.mxu0 0.0
    %1825 = vmatpush1.msra.mxu0 0.0
    %1826 = vmatprep.subr.mxu0 0.0
    %1827 = vmatpush1.msra.mxu0 0.0
    %1828 = vmatprep.subr.mxu0 0.0
    %1829 = vmatpush1.msra.mxu0 0.0
    %1830 = vmatprep.subr.mxu0 0.0
    %1831 = vmatpush1.msra.mxu0 0.0
    %1832 = vmatprep.mubr.f32.mxu0 0.0
    %1833 = vmatmul.mubr.f32.gmra.mrb[0].mxu0 %v1766
    %v1834 = vpop.f32.mrb[0].mxu0
    %v1835 = vadd.f32 %v86, %v1834
    %v1836 = vpop.f32.mrb[0].mxu0
    %1837 = vdwg.mxu0
    %1839 = vrot.lane.b32.xlu0 %v1762, 32
    %v1840 = vpop.permute.xlu0 %1839
    %v1841 = vsel %vm89, %v1840, 0
    %1843 = vmatprep.subr.mxu0 0.0
    %1844 = vmatpush1.msra.mxu0 %v73
    %1845 = vmatprep.subr.mxu0 0.0
    %1846 = vmatpush1.msra.mxu0 %v74
    %1847 = vmatprep.subr.mxu0 0.0
    %1848 = vmatpush1.msra.mxu0 %v75
    %1849 = vmatprep.subr.mxu0 0.0
    %1850 = vmatpush1.msra.mxu0 %v76
    %1851 = vmatprep.subr.mxu0 0.0
    %1852 = vmatpush1.msra.mxu0 0.0
    %1853 = vmatprep.subr.mxu0 0.0
    %1854 = vmatpush1.msra.mxu0 0.0
    %1855 = vmatprep.subr.mxu0 0.0
    %1856 = vmatpush1.msra.mxu0 0.0
    %1857 = vmatprep.subr.mxu0 0.0
    %1858 = vmatpush1.msra.mxu0 0.0
    %1859 = vmatprep.subr.mxu0 0.0
    %1860 = vmatpush1.msra.mxu0 0.0
    %1861 = vmatprep.subr.mxu0 0.0
    %1862 = vmatpush1.msra.mxu0 0.0
    %1863 = vmatprep.subr.mxu0 0.0
    %1864 = vmatpush1.msra.mxu0 0.0
    %1865 = vmatprep.subr.mxu0 0.0
    %1866 = vmatpush1.msra.mxu0 0.0
    %1867 = vmatprep.subr.mxu0 0.0
    %1868 = vmatpush1.msra.mxu0 0.0
    %1869 = vmatprep.subr.mxu0 0.0
    %1870 = vmatpush1.msra.mxu0 0.0
    %1871 = vmatprep.subr.mxu0 0.0
    %1872 = vmatpush1.msra.mxu0 0.0
    %1873 = vmatprep.subr.mxu0 0.0
    %1874 = vmatpush1.msra.mxu0 0.0
    %1875 = vmatprep.subr.mxu0 0.0
    %1876 = vmatpush1.msra.mxu0 0.0
    %1877 = vmatprep.subr.mxu0 0.0
    %1878 = vmatpush1.msra.mxu0 0.0
    %1879 = vmatprep.subr.mxu0 0.0
    %1880 = vmatpush1.msra.mxu0 0.0
    %1881 = vmatprep.subr.mxu0 0.0
    %1882 = vmatpush1.msra.mxu0 0.0
    %1883 = vmatprep.subr.mxu0 0.0
    %1884 = vmatpush1.msra.mxu0 0.0
    %1885 = vmatprep.subr.mxu0 0.0
    %1886 = vmatpush1.msra.mxu0 0.0
    %1887 = vmatprep.subr.mxu0 0.0
    %1888 = vmatpush1.msra.mxu0 0.0
    %1889 = vmatprep.subr.mxu0 0.0
    %1890 = vmatpush1.msra.mxu0 0.0
    %1891 = vmatprep.subr.mxu0 0.0
    %1892 = vmatpush1.msra.mxu0 0.0
    %1893 = vmatprep.subr.mxu0 0.0
    %1894 = vmatpush1.msra.mxu0 0.0
    %1895 = vmatprep.subr.mxu0 0.0
    %1896 = vmatpush1.msra.mxu0 0.0
    %1897 = vmatprep.subr.mxu0 0.0
    %1898 = vmatpush1.msra.mxu0 0.0
    %1899 = vmatprep.subr.mxu0 0.0
    %1900 = vmatpush1.msra.mxu0 0.0
    %1901 = vmatprep.subr.mxu0 0.0
    %1902 = vmatpush1.msra.mxu0 0.0
    %1903 = vmatprep.subr.mxu0 0.0
    %1904 = vmatpush1.msra.mxu0 0.0
    %1905 = vmatprep.subr.mxu0 0.0
    %1906 = vmatpush1.msra.mxu0 0.0
    %1907 = vmatprep.mubr.f32.mxu0 0.0
    %1908 = vmatmul.mubr.f32.gmra.mrb[0].mxu0 %v1841
    %v1909 = vpop.f32.mrb[0].mxu0
    %v1910 = vadd.f32 0.0, %v1909
    %v1911 = vpop.f32.mrb[0].mxu0
    %1912 = vdwg.mxu0
    %v1913 = vadd.f32 %v1835, %v1910
    %v1914 = vtanh.pop %v1913
    %v1915 = vmul.f32 %v1914, 0.5
    %v1916 = vadd.f32 %v1915, 0.5
    %v1917 = vmul.f32 %v1916, %v1663
    %1919 = vrot.lane.b32.xlu0 %v1914, 64
    %v1920 = vpop.permute.xlu0 %1919
    %v1922 = vmul.f32 %v1916, %v1920
    %1924 = vrot.lane.b32.xlu0 %v1922, 32
    %v1925 = vpop.permute.xlu0 %1924
    %v1927 = vadd.f32 %v1917, %v1925
    %v1928 = vtanh.pop %v1927
    %1930 = vrot.lane.b32.xlu0 %v1928, 64
    %v1931 = vpop.permute.xlu0 %1930
    %v1933 = vmul.f32 %v1916, %v1931
    %s1934 = scalar_lea.vmem [#allocation3], 56
    %v1935 = vld [vmem:[%s1934] sm:$0xff]
    %1936 = vmatprep.subr.mxu0 0.0
    %1937 = vmatpush1.msra.mxu0 %v69
    %1938 = vmatprep.subr.mxu0 0.0
    %1939 = vmatpush1.msra.mxu0 %v70
    %1940 = vmatprep.subr.mxu0 0.0
    %1941 = vmatpush1.msra.mxu0 %v71
    %1942 = vmatprep.subr.mxu0 0.0
    %1943 = vmatpush1.msra.mxu0 %v72
    %1944 = vmatprep.subr.mxu0 0.0
    %1945 = vmatpush1.msra.mxu0 0.0
    %1946 = vmatprep.subr.mxu0 0.0
    %1947 = vmatpush1.msra.mxu0 0.0
    %1948 = vmatprep.subr.mxu0 0.0
    %1949 = vmatpush1.msra.mxu0 0.0
    %1950 = vmatprep.subr.mxu0 0.0
    %1951 = vmatpush1.msra.mxu0 0.0
    %1952 = vmatprep.subr.mxu0 0.0
    %1953 = vmatpush1.msra.mxu0 0.0
    %1954 = vmatprep.subr.mxu0 0.0
    %1955 = vmatpush1.msra.mxu0 0.0
    %1956 = vmatprep.subr.mxu0 0.0
    %1957 = vmatpush1.msra.mxu0 0.0
    %1958 = vmatprep.subr.mxu0 0.0
    %1959 = vmatpush1.msra.mxu0 0.0
    %1960 = vmatprep.subr.mxu0 0.0
    %1961 = vmatpush1.msra.mxu0 0.0
    %1962 = vmatprep.subr.mxu0 0.0
    %1963 = vmatpush1.msra.mxu0 0.0
    %1964 = vmatprep.subr.mxu0 0.0
    %1965 = vmatpush1.msra.mxu0 0.0
    %1966 = vmatprep.subr.mxu0 0.0
    %1967 = vmatpush1.msra.mxu0 0.0
    %1968 = vmatprep.subr.mxu0 0.0
    %1969 = vmatpush1.msra.mxu0 0.0
    %1970 = vmatprep.subr.mxu0 0.0
    %1971 = vmatpush1.msra.mxu0 0.0
    %1972 = vmatprep.subr.mxu0 0.0
    %1973 = vmatpush1.msra.mxu0 0.0
    %1974 = vmatprep.subr.mxu0 0.0
    %1975 = vmatpush1.msra.mxu0 0.0
    %1976 = vmatprep.subr.mxu0 0.0
    %1977 = vmatpush1.msra.mxu0 0.0
    %1978 = vmatprep.subr.mxu0 0.0
    %1979 = vmatpush1.msra.mxu0 0.0
    %1980 = vmatprep.subr.mxu0 0.0
    %1981 = vmatpush1.msra.mxu0 0.0
    %1982 = vmatprep.subr.mxu0 0.0
    %1983 = vmatpush1.msra.mxu0 0.0
    %1984 = vmatprep.subr.mxu0 0.0
    %1985 = vmatpush1.msra.mxu0 0.0
    %1986 = vmatprep.subr.mxu0 0.0
    %1987 = vmatpush1.msra.mxu0 0.0
    %1988 = vmatprep.subr.mxu0 0.0
    %1989 = vmatpush1.msra.mxu0 0.0
    %1990 = vmatprep.subr.mxu0 0.0
    %1991 = vmatpush1.msra.mxu0 0.0
    %1992 = vmatprep.subr.mxu0 0.0
    %1993 = vmatpush1.msra.mxu0 0.0
    %1994 = vmatprep.subr.mxu0 0.0
    %1995 = vmatpush1.msra.mxu0 0.0
    %1996 = vmatprep.subr.mxu0 0.0
    %1997 = vmatpush1.msra.mxu0 0.0
    %1998 = vmatprep.subr.mxu0 0.0
    %1999 = vmatpush1.msra.mxu0 0.0
    %2000 = vmatprep.mubr.f32.mxu0 0.0
    %2001 = vmatmul.mubr.f32.gmra.mrb[0].mxu0 %v1841
    %v2002 = vpop.f32.mrb[0].mxu0
    %v2003 = vadd.f32 0.0, %v2002
    %v2004 = vpop.f32.mrb[0].mxu0
    %2005 = vdwg.mxu0
    %v2006 = vadd.f32 %v1935, %v2003
    %v2007 = vtanh.pop %v2006
    %v2008 = vmul.f32 %v2007, 0.5
    %v2009 = vadd.f32 %v2008, 0.5
    %v2010 = vmul.f32 %v2009, %v1756
    %2012 = vrot.lane.b32.xlu0 %v2007, 64
    %v2013 = vpop.permute.xlu0 %2012
    %v2015 = vmul.f32 %v2009, %v2013
    %2017 = vrot.lane.b32.xlu0 %v2015, 32
    %v2018 = vpop.permute.xlu0 %2017
    %v2020 = vadd.f32 %v2010, %v2018
    %v2021 = vtanh.pop %v2020
    %2023 = vrot.lane.b32.xlu0 %v2021, 64
    %v2024 = vpop.permute.xlu0 %2023
    %v2026 = vmul.f32 %v2009, %v2024
    %2028 = vrot.lane.b32.xlu0 %v1933, 32
    %v2029 = vpop.permute.xlu0 %2028
    %v2030 = vsel %vm89, %v2029, 0
    %2032 = vmatprep.subr.mxu0 0.0
    %2033 = vmatpush1.msra.mxu0 %v77
    %2034 = vmatprep.subr.mxu0 0.0
    %2035 = vmatpush1.msra.mxu0 %v78
    %2036 = vmatprep.subr.mxu0 0.0
    %2037 = vmatpush1.msra.mxu0 %v79
    %2038 = vmatprep.subr.mxu0 0.0
    %2039 = vmatpush1.msra.mxu0 %v80
    %2040 = vmatprep.subr.mxu0 0.0
    %2041 = vmatpush1.msra.mxu0 0.0
    %2042 = vmatprep.subr.mxu0 0.0
    %2043 = vmatpush1.msra.mxu0 0.0
    %2044 = vmatprep.subr.mxu0 0.0
    %2045 = vmatpush1.msra.mxu0 0.0
    %2046 = vmatprep.subr.mxu0 0.0
    %2047 = vmatpush1.msra.mxu0 0.0
    %2048 = vmatprep.subr.mxu0 0.0
    %2049 = vmatpush1.msra.mxu0 0.0
    %2050 = vmatprep.subr.mxu0 0.0
    %2051 = vmatpush1.msra.mxu0 0.0
    %2052 = vmatprep.subr.mxu0 0.0
    %2053 = vmatpush1.msra.mxu0 0.0
    %2054 = vmatprep.subr.mxu0 0.0
    %2055 = vmatpush1.msra.mxu0 0.0
    %2056 = vmatprep.subr.mxu0 0.0
    %2057 = vmatpush1.msra.mxu0 0.0
    %2058 = vmatprep.subr.mxu0 0.0
    %2059 = vmatpush1.msra.mxu0 0.0
    %2060 = vmatprep.subr.mxu0 0.0
    %2061 = vmatpush1.msra.mxu0 0.0
    %2062 = vmatprep.subr.mxu0 0.0
    %2063 = vmatpush1.msra.mxu0 0.0
    %2064 = vmatprep.subr.mxu0 0.0
    %2065 = vmatpush1.msra.mxu0 0.0
    %2066 = vmatprep.subr.mxu0 0.0
    %2067 = vmatpush1.msra.mxu0 0.0
    %2068 = vmatprep.subr.mxu0 0.0
    %2069 = vmatpush1.msra.mxu0 0.0
    %2070 = vmatprep.subr.mxu0 0.0
    %2071 = vmatpush1.msra.mxu0 0.0
    %2072 = vmatprep.subr.mxu0 0.0
    %2073 = vmatpush1.msra.mxu0 0.0
    %2074 = vmatprep.subr.mxu0 0.0
    %2075 = vmatpush1.msra.mxu0 0.0
    %2076 = vmatprep.subr.mxu0 0.0
    %2077 = vmatpush1.msra.mxu0 0.0
    %2078 = vmatprep.subr.mxu0 0.0
    %2079 = vmatpush1.msra.mxu0 0.0
    %2080 = vmatprep.subr.mxu0 0.0
    %2081 = vmatpush1.msra.mxu0 0.0
    %2082 = vmatprep.subr.mxu0 0.0
    %2083 = vmatpush1.msra.mxu0 0.0
    %2084 = vmatprep.subr.mxu0 0.0
    %2085 = vmatpush1.msra.mxu0 0.0
    %2086 = vmatprep.subr.mxu0 0.0
    %2087 = vmatpush1.msra.mxu0 0.0
    %2088 = vmatprep.subr.mxu0 0.0
    %2089 = vmatpush1.msra.mxu0 0.0
    %2090 = vmatprep.subr.mxu0 0.0
    %2091 = vmatpush1.msra.mxu0 0.0
    %2092 = vmatprep.subr.mxu0 0.0
    %2093 = vmatpush1.msra.mxu0 0.0
    %2094 = vmatprep.subr.mxu0 0.0
    %2095 = vmatpush1.msra.mxu0 0.0
    %2096 = vmatprep.mubr.f32.mxu0 0.0
    %2097 = vmatmul.mubr.f32.gmra.mrb[0].mxu0 %v2030
    %v2098 = vpop.f32.mrb[0].mxu0
    %v2099 = vadd.f32 %v86, %v2098
    %v2100 = vpop.f32.mrb[0].mxu0
    %2101 = vdwg.mxu0
    %2103 = vrot.lane.b32.xlu0 %v2026, 32
    %v2104 = vpop.permute.xlu0 %2103
    %v2105 = vsel %vm89, %v2104, 0
    %2107 = vmatprep.subr.mxu0 0.0
    %2108 = vmatpush1.msra.mxu0 %v73
    %2109 = vmatprep.subr.mxu0 0.0
    %2110 = vmatpush1.msra.mxu0 %v74
    %2111 = vmatprep.subr.mxu0 0.0
    %2112 = vmatpush1.msra.mxu0 %v75
    %2113 = vmatprep.subr.mxu0 0.0
    %2114 = vmatpush1.msra.mxu0 %v76
    %2115 = vmatprep.subr.mxu0 0.0
    %2116 = vmatpush1.msra.mxu0 0.0
    %2117 = vmatprep.subr.mxu0 0.0
    %2118 = vmatpush1.msra.mxu0 0.0
    %2119 = vmatprep.subr.mxu0 0.0
    %2120 = vmatpush1.msra.mxu0 0.0
    %2121 = vmatprep.subr.mxu0 0.0
    %2122 = vmatpush1.msra.mxu0 0.0
    %2123 = vmatprep.subr.mxu0 0.0
    %2124 = vmatpush1.msra.mxu0 0.0
    %2125 = vmatprep.subr.mxu0 0.0
    %2126 = vmatpush1.msra.mxu0 0.0
    %2127 = vmatprep.subr.mxu0 0.0
    %2128 = vmatpush1.msra.mxu0 0.0
    %2129 = vmatprep.subr.mxu0 0.0
    %2130 = vmatpush1.msra.mxu0 0.0
    %2131 = vmatprep.subr.mxu0 0.0
    %2132 = vmatpush1.msra.mxu0 0.0
    %2133 = vmatprep.subr.mxu0 0.0
    %2134 = vmatpush1.msra.mxu0 0.0
    %2135 = vmatprep.subr.mxu0 0.0
    %2136 = vmatpush1.msra.mxu0 0.0
    %2137 = vmatprep.subr.mxu0 0.0
    %2138 = vmatpush1.msra.mxu0 0.0
    %2139 = vmatprep.subr.mxu0 0.0
    %2140 = vmatpush1.msra.mxu0 0.0
    %2141 = vmatprep.subr.mxu0 0.0
    %2142 = vmatpush1.msra.mxu0 0.0
    %2143 = vmatprep.subr.mxu0 0.0
    %2144 = vmatpush1.msra.mxu0 0.0
    %2145 = vmatprep.subr.mxu0 0.0
    %2146 = vmatpush1.msra.mxu0 0.0
    %2147 = vmatprep.subr.mxu0 0.0
    %2148 = vmatpush1.msra.mxu0 0.0
    %2149 = vmatprep.subr.mxu0 0.0
    %2150 = vmatpush1.msra.mxu0 0.0
    %2151 = vmatprep.subr.mxu0 0.0
    %2152 = vmatpush1.msra.mxu0 0.0
    %2153 = vmatprep.subr.mxu0 0.0
    %2154 = vmatpush1.msra.mxu0 0.0
    %2155 = vmatprep.subr.mxu0 0.0
    %2156 = vmatpush1.msra.mxu0 0.0
    %2157 = vmatprep.subr.mxu0 0.0
    %2158 = vmatpush1.msra.mxu0 0.0
    %2159 = vmatprep.subr.mxu0 0.0
    %2160 = vmatpush1.msra.mxu0 0.0
    %2161 = vmatprep.subr.mxu0 0.0
    %2162 = vmatpush1.msra.mxu0 0.0
    %2163 = vmatprep.subr.mxu0 0.0
    %2164 = vmatpush1.msra.mxu0 0.0
    %2165 = vmatprep.subr.mxu0 0.0
    %2166 = vmatpush1.msra.mxu0 0.0
    %2167 = vmatprep.subr.mxu0 0.0
    %2168 = vmatpush1.msra.mxu0 0.0
    %2169 = vmatprep.subr.mxu0 0.0
    %2170 = vmatpush1.msra.mxu0 0.0
    %2171 = vmatprep.mubr.f32.mxu0 0.0
    %2172 = vmatmul.mubr.f32.gmra.mrb[0].mxu0 %v2105
    %v2173 = vpop.f32.mrb[0].mxu0
    %v2174 = vadd.f32 0.0, %v2173
    %v2175 = vpop.f32.mrb[0].mxu0
    %2176 = vdwg.mxu0
    %v2177 = vadd.f32 %v2099, %v2174
    %v2178 = vtanh.pop %v2177
    %v2179 = vmul.f32 %v2178, 0.5
    %v2180 = vadd.f32 %v2179, 0.5
    %v2181 = vmul.f32 %v2180, %v1927
    %2183 = vrot.lane.b32.xlu0 %v2178, 64
    %v2184 = vpop.permute.xlu0 %2183
    %v2186 = vmul.f32 %v2180, %v2184
    %2188 = vrot.lane.b32.xlu0 %v2186, 32
    %v2189 = vpop.permute.xlu0 %2188
    %v2191 = vadd.f32 %v2181, %v2189
    %v2192 = vtanh.pop %v2191
    %2194 = vrot.lane.b32.xlu0 %v2192, 64
    %v2195 = vpop.permute.xlu0 %2194
    %v2197 = vmul.f32 %v2180, %v2195
    %v2198 = vld [vmem:[%s5] sm:$0xff]
    %v2199 = vld [vmem:[%s5 + $0x8] sm:$0xff]
    %v2200 = vld [vmem:[%s5 + $0x10] sm:$0xff]
    %v2201 = vld [vmem:[%s5 + $0x18] sm:$0xff]
    %v2202 = vld [vmem:[#allocation2] sm:$0x1]
    %v2204 = vlaneseq
    %v2205 = vshrl.u32 %v2204, 7
    %v2206 = vsub.s32 0, %v2205
    %v2207 = vrot.slane %v2202, %v2206
    %2210 = vrot.lane.b32.xlu0 %v2197, 32
    %v2211 = vpop.permute.xlu0 %2210
    %v2212 = vsel %vm89, %v2211, 0
    %2214 = vmatprep.subr.mxu0 0.0
    %2215 = vmatpush1.msra.mxu0 %v2198
    %2216 = vmatprep.subr.mxu0 0.0
    %2217 = vmatpush1.msra.mxu0 %v2199
    %2218 = vmatprep.subr.mxu0 0.0
    %2219 = vmatpush1.msra.mxu0 %v2200
    %2220 = vmatprep.subr.mxu0 0.0
    %2221 = vmatpush1.msra.mxu0 %v2201
    %2222 = vmatprep.subr.mxu0 0.0
    %2223 = vmatpush1.msra.mxu0 0.0
    %2224 = vmatprep.subr.mxu0 0.0
    %2225 = vmatpush1.msra.mxu0 0.0
    %2226 = vmatprep.subr.mxu0 0.0
    %2227 = vmatpush1.msra.mxu0 0.0
    %2228 = vmatprep.subr.mxu0 0.0
    %2229 = vmatpush1.msra.mxu0 0.0
    %2230 = vmatprep.subr.mxu0 0.0
    %2231 = vmatpush1.msra.mxu0 0.0
    %2232 = vmatprep.subr.mxu0 0.0
    %2233 = vmatpush1.msra.mxu0 0.0
    %2234 = vmatprep.subr.mxu0 0.0
    %2235 = vmatpush1.msra.mxu0 0.0
    %2236 = vmatprep.subr.mxu0 0.0
    %2237 = vmatpush1.msra.mxu0 0.0
    %2238 = vmatprep.subr.mxu0 0.0
    %2239 = vmatpush1.msra.mxu0 0.0
    %2240 = vmatprep.subr.mxu0 0.0
    %2241 = vmatpush1.msra.mxu0 0.0
    %2242 = vmatprep.subr.mxu0 0.0
    %2243 = vmatpush1.msra.mxu0 0.0
    %2244 = vmatprep.subr.mxu0 0.0
    %2245 = vmatpush1.msra.mxu0 0.0
    %2246 = vmatprep.subr.mxu0 0.0
    %2247 = vmatpush1.msra.mxu0 0.0
    %2248 = vmatprep.subr.mxu0 0.0
    %2249 = vmatpush1.msra.mxu0 0.0
    %2250 = vmatprep.subr.mxu0 0.0
    %2251 = vmatpush1.msra.mxu0 0.0
    %2252 = vmatprep.subr.mxu0 0.0
    %2253 = vmatpush1.msra.mxu0 0.0
    %2254 = vmatprep.subr.mxu0 0.0
    %2255 = vmatpush1.msra.mxu0 0.0
    %2256 = vmatprep.subr.mxu0 0.0
    %2257 = vmatpush1.msra.mxu0 0.0
    %2258 = vmatprep.subr.mxu0 0.0
    %2259 = vmatpush1.msra.mxu0 0.0
    %2260 = vmatprep.subr.mxu0 0.0
    %2261 = vmatpush1.msra.mxu0 0.0
    %2262 = vmatprep.subr.mxu0 0.0
    %2263 = vmatpush1.msra.mxu0 0.0
    %2264 = vmatprep.subr.mxu0 0.0
    %2265 = vmatpush1.msra.mxu0 0.0
    %2266 = vmatprep.subr.mxu0 0.0
    %2267 = vmatpush1.msra.mxu0 0.0
    %2268 = vmatprep.subr.mxu0 0.0
    %2269 = vmatpush1.msra.mxu0 0.0
    %2270 = vmatprep.subr.mxu0 0.0
    %2271 = vmatpush1.msra.mxu0 0.0
    %2272 = vmatprep.subr.mxu0 0.0
    %2273 = vmatpush1.msra.mxu0 0.0
    %2274 = vmatprep.subr.mxu0 0.0
    %2275 = vmatpush1.msra.mxu0 0.0
    %2276 = vmatprep.subr.mxu0 0.0
    %2277 = vmatpush1.msra.mxu0 0.0
    %2278 = vmatprep.mubr.f32.mxu0 0.0
    %2279 = vmatmul.mubr.f32.gmra.mrb[0].mxu0 %v2212
    %v2280 = vpop.f32.mrb[0].mxu0
    %v2281 = vadd.f32 %v2207, %v2280
    %v2282 = vpop.f32.mrb[0].mxu0
    %2283 = vdwg.mxu0
    %vm2284 = vcmask 7168
    %2285 = vst.msk [vmem:[%s7] sm:$0xff] %vm2284, %v2281
    // Predicated region
    $region42: #{tpu_custom_call.1} parent=1 // pred_check
      _
    $region43: #{tpu_custom_call.1} parent=1 // pred_check_branch
      %2287 = sbr.rel (0) target = $region45
    $region44: #{tpu_custom_call.1} parent=1 // pred_region
      _
    $region45: #{tpu_custom_call.1} parent=1 // pred_fallthru
      _
    // Predicated region
    $region46: #{tpu_custom_call.1} parent=1 // pred_check
      _
    $region47: #{tpu_custom_call.1} parent=1 // pred_check_branch
      %2289 = sbr.rel (0) target = $region49
    $region48: #{tpu_custom_call.1} parent=1 // pred_region
      _
    $region49: #{tpu_custom_call.1} parent=1 // pred_fallthru
      _
    %2290 = vsyncpa [#allocation4], 1
    %2291 = vsyncpa [#allocation6], 1

</llo_original>
